<compile_context>
chip_gen: v6e
topology: v6e:2x2x1
jax: 0.10.0
libtpu: 0.0.40
codegen_flags: <defaults>
</compile_context>

<pallas_src>
import functools
import math

import jax
import jax.numpy as jnp
import numpy as np
from jax.experimental import pallas as pl
from jax.experimental.pallas import tpu as pltpu


# ---------------------------------------------------------------------------
# Shared math helpers (used by both the kernel and the pure-JAX reference).
# ---------------------------------------------------------------------------

def _gelu(x):
    # TODO(synk): PyTorch nn.GELU() default is the exact erf form; the tanh approximation is
    # used here (max abs deviation ~3e-4) because erf has no guaranteed Mosaic lowering.
    c = math.sqrt(2.0 / math.pi)
    return 0.5 * x * (1.0 + jnp.tanh(c * (x + 0.044715 * x * x * x)))


def _layer_norm(x, gamma, beta, eps):
    mu = jnp.mean(x, axis=-1, keepdims=True)
    var = jnp.mean(jnp.square(x - mu), axis=-1, keepdims=True)
    return (x - mu) * jax.lax.rsqrt(var + eps) * gamma + beta


# ---------------------------------------------------------------------------
# Pallas kernel: one (batch block, layer) per grid step.
# ---------------------------------------------------------------------------

def _transformer_kernel(x_ref, wqkv_ref, wo_ref, w1_ref, b1_ref, w2_ref,
                        vecs_ref, fvec_ref,
                        o_ref,
                        xbuf, attn_buf,
                        *, num_heads, eps, seq_len, block_batch):
    """Refs per grid step (grid = (batch_block, layer)):
      x_ref    : (TB*N, D)  token slab of this batch block (read only at layer 0)
      wqkv_ref : (D, 3D)    fused (to_qkv ∘ in_proj) weight, pre-transposed, q-cols pre-scaled
      wo_ref   : (D, D)     out_proj weight (pre-transposed)
      w1_ref   : (D, M)     FFN linear-1 weight;  b1_ref: (1, M)
      w2_ref   : (M, D)     FFN linear-2 weight
      vecs_ref : (8, D)     rows: bq(scaled), bk, bv, bo, ln_gamma, ln_beta, b2, pad
      fvec_ref : (8, D)     rows: final-norm gamma, beta, pad (grid-invariant)
      o_ref    : (TB*N, D)  output (written only at the last layer)
      xbuf     : (TB*N, D)  f32 residual stream carried across the depth axis
      attn_buf : (TB*N, D)  f32 per-head attention outputs (written by column group)
    """
    layer = pl.program_id(1)
    n_layers = pl.num_programs(1)

    @pl.when(layer == 0)
    def _():
        xbuf[...] = x_ref[...].astype(jnp.float32)

    x = xbuf[...]                                  # (R, D) f32 residual stream
    D = x.shape[-1]
    H = num_heads
    Dh = D // H
    N = seq_len
    TB = block_batch
    cdt = wqkv_ref.dtype                           # matmul operand dtype (bf16 or f32)
    contract_last = (((1,), (1,)), ((), ()))       # dot over last dim of both operands

    bq = vecs_ref[0:1, :]                          # scale pre-folded
    bk = vecs_ref[1:2, :]
    bv = vecs_ref[2:3, :]
    bo = vecs_ref[3:4, :]
    g1 = vecs_ref[4:5, :]
    be1 = vecs_ref[5:6, :]
    b2 = vecs_ref[6:7, :]

    # ---- Attention: one fused QKV projection over the whole (TB*N, D) slab ----
    xc = x.astype(cdt)
    qkv = jnp.dot(xc, wqkv_ref[...], preferred_element_type=jnp.float32)    # (R, 3D) f32
    qc = (qkv[:, 0 * D:1 * D] + bq).astype(cdt)    # cast once, before the head loops
    kc = (qkv[:, 1 * D:2 * D] + bk).astype(cdt)
    vc = (qkv[:, 2 * D:3 * D] + bv).astype(cdt)

    # Static unrolled loops: per-(batch element, head) 2-D MXU dots; PV results land directly
    # in attn_buf column groups (no concatenate / XLU relayout).
    for t in range(TB):
        rs = slice(t * N, (t + 1) * N)
        for h in range(H):
            cs = slice(h * Dh, (h + 1) * Dh)
            qh = qc[rs, cs]
            kh = kc[rs, cs]
            s = jax.lax.dot_general(qh, kh, contract_last,
                                    preferred_element_type=jnp.float32)     # (N, N)
            s = s - jnp.max(s, axis=-1, keepdims=True)
            p = jnp.exp(s)
            p = p * pl.reciprocal(jnp.sum(p, axis=-1, keepdims=True), approx=True)
            attn_buf[rs, cs] = jnp.dot(p.astype(cdt), vc[rs, cs],
                                       preferred_element_type=jnp.float32)  # (N, Dh)

    attn = jnp.dot(attn_buf[...].astype(cdt), wo_ref[...],
                   preferred_element_type=jnp.float32) + bo
    y = x + attn                                   # residual 1 (f32)

    # ---- FeedForward: LayerNorm -> Linear -> GELU -> Linear ----
    ln = _layer_norm(y, g1, be1, eps)
    hdn = _gelu(jnp.dot(ln.astype(cdt), w1_ref[...],
                        preferred_element_type=jnp.float32) + b1_ref[...])
    ffn = jnp.dot(hdn.astype(cdt), w2_ref[...],
                  preferred_element_type=jnp.float32) + b2
    z = y + ffn                                    # residual 2 (f32)

    xbuf[...] = z                                  # carry to next layer

    @pl.when(layer == n_layers - 1)
    def _():
        o_ref[...] = _layer_norm(z, fvec_ref[0:1, :], fvec_ref[1:2, :],
                                 eps).astype(o_ref.dtype)


# ---------------------------------------------------------------------------
# Wrapper: host-side weight fusion / transposition, batch blocking, grid setup.
# ---------------------------------------------------------------------------

def transformer_forward(x, params, *, num_heads, eps=1e-5,
                        compute_dtype=jnp.bfloat16, block_batch=None):
    """x: (B, N, D) -> (B, N, D). Matches Transformer.forward (dropout=0 / eval)."""
    B, N, D = x.shape
    layers = params["layers"]
    L = len(layers)
    H = num_heads
    Dh = D // H
    scale = Dh ** -0.5
    hi = jax.lax.Precision.HIGHEST

    # ---- Host-side (batch-invariant) weight fusion / pre-transposition ----
    def fused_qkv_wT(lyr):
        # Effective q/k/v weight = (in_proj_chunk @ to_qkv_chunk), transposed so the kernel
        # computes x @ W; the 1/sqrt(Dh) attention scale is folded into the q columns.
        cols = []
        for i, s in ((0, scale), (1, 1.0), (2, 1.0)):
            w_qkv = lyr["to_qkv_w"][i * D:(i + 1) * D, :]     # (D, D)
            w_in = lyr["in_proj_w"][i * D:(i + 1) * D, :]     # (D, D)
            cols.append((s * jnp.matmul(w_in, w_qkv, precision=hi)).T)
        return jnp.concatenate(cols, axis=1)                  # (D, 3D)

    def layer_vecs(lyr):
        rows = [scale * lyr["in_proj_b"][0 * D:1 * D],        # bq (pre-scaled)
                lyr["in_proj_b"][1 * D:2 * D],                # bk
                lyr["in_proj_b"][2 * D:3 * D],                # bv
                lyr["out_proj_b"],                            # bo
                lyr["ln_w"], lyr["ln_b"],                     # FFN LayerNorm gamma/beta
                lyr["lin2_b"],                                # b2
                jnp.zeros((D,), jnp.float32)]                 # sublane pad
        return jnp.stack(rows).astype(jnp.float32)            # (8, D)

    wqkv = jnp.stack([fused_qkv_wT(l) for l in layers]).astype(compute_dtype)  # (L, D, 3D)
    wo = jnp.stack([l["out_proj_w"].T for l in layers]).astype(compute_dtype)  # (L, D, D)
    w1 = jnp.stack([l["lin1_w"].T for l in layers]).astype(compute_dtype)      # (L, D, M)
    w2 = jnp.stack([l["lin2_w"].T for l in layers]).astype(compute_dtype)      # (L, M, D)
    b1 = jnp.stack([l["lin1_b"].reshape(1, -1) for l in layers]
                   ).astype(jnp.float32)                                       # (L, 1, M)
    vecs = jnp.stack([layer_vecs(l) for l in layers])                          # (L, 8, D)
    fvec = jnp.concatenate([params["norm_w"].reshape(1, D),
                            params["norm_b"].reshape(1, D),
                            jnp.zeros((6, D), jnp.float32)], axis=0)           # (8, D)
    M = w1.shape[-1]

    # ---- Batch blocking: grid = (num_batch_blocks, depth) ----
    if block_batch is None:
        target = max(1, min(B, pl.cdiv(256, N)))   # aim for ~256 MXU rows per matmul
        tb = 1
        for cand in range(target, 0, -1):          # largest divisor of B <= target (no pad)
            if B % cand == 0:
                tb = cand
                break
    else:
        tb = max(1, min(block_batch, B))
    nb = pl.cdiv(B, tb)
    Bp = nb * tb
    rows = tb * N

    xf = x.reshape(B * N, D)
    if Bp != B:                                    # zero-pad partial batch block (sliced off)
        xf = jnp.concatenate([xf, jnp.zeros(((Bp - B) * N, D), x.dtype)], axis=0)

    # ---- Explicit VMEM budget: double-buffered streamed weights + activations + scratch ----
    cbytes = jnp.dtype(compute_dtype).itemsize
    streamed = (4 * D * D + 2 * D * M) * cbytes + (8 * D + M) * 4   # per-layer weight set
    block_io = 2 * rows * D * x.dtype.itemsize                      # x + out blocks
    scratch_b = 2 * rows * D * 4                                    # xbuf + attn_buf
    live_act = rows * (4 * D + 2 * M) * 4 + 2 * N * N * 4           # qkv/ffn acts + scores
    need = 2 * streamed + 2 * block_io + scratch_b + live_act + (4 << 20)
    vmem_limit = int(min(max(need, 32 << 20), 128 << 20))

    kernel = functools.partial(_transformer_kernel, num_heads=H, eps=eps,
                               seq_len=N, block_batch=tb)
    per_batch = lambda b, l: (b, 0)      # token slab / output: resident across the depth axis
    per_layer = lambda b, l: (l, 0, 0)   # weights: streamed layer by layer

    out = pl.pallas_call(
        kernel,
        out_shape=jax.ShapeDtypeStruct((Bp * N, D), x.dtype),
        grid_spec=pltpu.PrefetchScalarGridSpec(
            num_scalar_prefetch=0,
            grid=(nb, L),
            in_specs=[
                pl.BlockSpec((rows, D), per_batch),            # x slab
                pl.BlockSpec((None, D, 3 * D), per_layer),     # fused qkv weight
                pl.BlockSpec((None, D, D), per_layer),         # out-proj weight
                pl.BlockSpec((None, D, M), per_layer),         # ffn w1
                pl.BlockSpec((None, 1, M), per_layer),         # ffn b1
                pl.BlockSpec((None, M, D), per_layer),         # ffn w2
                pl.BlockSpec((None, 8, D), per_layer),         # packed per-layer vectors
                pl.BlockSpec((8, D), lambda b, l: (0, 0)),     # packed final-norm vectors
            ],
            out_specs=pl.BlockSpec((rows, D), per_batch),
            scratch_shapes=[pltpu.VMEM((rows, D), jnp.float32),   # residual stream
                            pltpu.VMEM((rows, D), jnp.float32)],  # per-head attn outputs
        ),
        compiler_params=pltpu.CompilerParams(
            dimension_semantics=("parallel", "arbitrary"),
            vmem_limit_bytes=vmem_limit),
    )(xf, wqkv, wo, w1, b1, w2, vecs, fvec)
    # TODO(synk): for very long sequences / huge D*M on v7x (64 MiB VMEM), tile the FFN over M
    # and use flash-style KV tiling instead of materializing full (N, N) scores per head.
    return out.reshape(Bp, N, D)[:B]


# ---------------------------------------------------------------------------
# Pure-JAX reference reproducing the PyTorch forward (un-fused, per-layer math).
# ---------------------------------------------------------------------------

def _reference(x, params, *, num_heads, eps=1e-5):
    B, N, D = x.shape
    H = num_heads
    Dh = D // H
    scale = Dh ** -0.5
    for lyr in params["layers"]:
        qkv0 = x @ lyr["to_qkv_w"].T
        q0, k0, v0 = jnp.split(qkv0, 3, axis=-1)
        wq_in, wk_in, wv_in = jnp.split(lyr["in_proj_w"], 3, axis=0)
        bq_in, bk_in, bv_in = jnp.split(lyr["in_proj_b"], 3, axis=0)
        q = q0 @ wq_in.T + bq_in
        k = k0 @ wk_in.T + bk_in
        v = v0 @ wv_in.T + bv_in
        qh = q.reshape(B, N, H, Dh).transpose(0, 2, 1, 3) * scale
        kh = k.reshape(B, N, H, Dh).transpose(0, 2, 1, 3)
        vh = v.reshape(B, N, H, Dh).transpose(0, 2, 1, 3)
        a = jax.nn.softmax(qh @ jnp.swapaxes(kh, -1, -2), axis=-1)
        o = (a @ vh).transpose(0, 2, 1, 3).reshape(B, N, D)
        o = o @ lyr["out_proj_w"].T + lyr["out_proj_b"]
        x = x + o
        ln = _layer_norm(x, lyr["ln_w"], lyr["ln_b"], eps)
        hdn = _gelu(ln @ lyr["lin1_w"].T + lyr["lin1_b"])
        x = x + (hdn @ lyr["lin2_w"].T + lyr["lin2_b"])
    return _layer_norm(x, params["norm_w"], params["norm_b"], eps)


if __name__ == "__main__":
    dim, depth, num_heads, head_dim, mlp_dim = 32, 2, 2, 16, 64
    B, N = 2, 8
    assert num_heads * head_dim == dim  # required by the residual connection in the module

    key = jax.random.PRNGKey(0)
    kx, kp = jax.random.split(key)

    def init_layer(k):
        ks = jax.random.split(k, 11)
        s = 0.1
        return {
            "to_qkv_w": s * jax.random.normal(ks[0], (3 * dim, dim), jnp.float32),
            "in_proj_w": s * jax.random.normal(ks[1], (3 * dim, dim), jnp.float32),
            "in_proj_b": s * jax.random.normal(ks[2], (3 * dim,), jnp.float32),
            "out_proj_w": s * jax.random.normal(ks[3], (dim, dim), jnp.float32),
            "out_proj_b": s * jax.random.normal(ks[4], (dim,), jnp.float32),
            "ln_w": 1.0 + s * jax.random.normal(ks[5], (dim,), jnp.float32),
            "ln_b": s * jax.random.normal(ks[6], (dim,), jnp.float32),
            "lin1_w": s * jax.random.normal(ks[7], (mlp_dim, dim), jnp.float32),
            "lin1_b": s * jax.random.normal(ks[8], (mlp_dim,), jnp.float32),
            "lin2_w": s * jax.random.normal(ks[9], (dim, mlp_dim), jnp.float32),
            "lin2_b": s * jax.random.normal(ks[10], (dim,), jnp.float32),
        }

    lkeys = jax.random.split(kp, depth + 1)
    params = {
        "layers": [init_layer(lkeys[i]) for i in range(depth)],
        "norm_w": 1.0 + 0.1 * jax.random.normal(
            jax.random.fold_in(lkeys[-1], 0), (dim,), jnp.float32),
        "norm_b": 0.1 * jax.random.normal(
            jax.random.fold_in(lkeys[-1], 1), (dim,), jnp.float32),
    }
    x = jax.random.normal(kx, (B, N, dim), jnp.float32)

    ref = jax.block_until_ready(_reference(x, params, num_heads=num_heads))

    # f32 matmul-operand path (tighter check)
    out_f32 = jax.block_until_ready(
        transformer_forward(x, params, num_heads=num_heads,
                            compute_dtype=jnp.float32))
    np.testing.assert_allclose(np.asarray(out_f32), np.asarray(ref),
                               rtol=3e-2, atol=3e-2)

    # default bf16 matmul-operand path (f32 accumulation / softmax / layernorm)
    out_bf16 = jax.block_until_ready(
        transformer_forward(x, params, num_heads=num_heads))
    np.testing.assert_allclose(np.asarray(out_bf16), np.asarray(ref),
                               rtol=7e-2, atol=7e-2)

    print("KERNEL_OK")
</pallas_src>

<mosaic_0001>
module attributes {stable_mosaic.version = 11 : i64} {
  func.func @_transformer_kernel(%arg0: i32, %arg1: i32, %arg2: memref<16x32xf32, #tpu.memory_space<vmem>>, %arg3: memref<1x32x96xf32, #tpu.memory_space<vmem>>, %arg4: memref<1x32x32xf32, #tpu.memory_space<vmem>>, %arg5: memref<1x32x64xf32, #tpu.memory_space<vmem>>, %arg6: memref<1x1x64xf32, #tpu.memory_space<vmem>>, %arg7: memref<1x64x32xf32, #tpu.memory_space<vmem>>, %arg8: memref<1x8x32xf32, #tpu.memory_space<vmem>>, %arg9: memref<8x32xf32, #tpu.memory_space<vmem>>, %arg10: memref<16x32xf32, #tpu.memory_space<vmem>>, %arg11: memref<16x32xf32, #tpu.memory_space<vmem>>, %arg12: memref<16x32xf32, #tpu.memory_space<vmem>>) attributes {dimension_semantics = [#tpu.dimension_semantics<parallel>, #tpu.dimension_semantics<arbitrary>], iteration_bounds = array<i64: 1, 2>, scalar_prefetch = 0 : i64, scratch_operands = 2 : i64, tpu.core_type = #tpu.core_type<tc>, window_params = [{transform_indices = @transform_0, window_bounds = array<i64: 16, 32>}, {transform_indices = @transform_1, window_bounds = array<i64: 1, 32, 96>}, {transform_indices = @transform_2, window_bounds = array<i64: 1, 32, 32>}, {transform_indices = @transform_3, window_bounds = array<i64: 1, 32, 64>}, {transform_indices = @transform_4, window_bounds = array<i64: 1, 1, 64>}, {transform_indices = @transform_5, window_bounds = array<i64: 1, 64, 32>}, {transform_indices = @transform_6, window_bounds = array<i64: 1, 8, 32>}, {pipeline_mode = #tpu.pipeline_mode<synchronous>, transform_indices = @transform_7, window_bounds = array<i64: 8, 32>}, {transform_indices = @transform_8, window_bounds = array<i64: 16, 32>}]} {
    %c0_i32 = arith.constant 0 : i32
    %0 = arith.cmpi eq, %arg1, %c0_i32 : i32
    %1 = arith.extui %0 : i1 to i32
    %c0_i32_0 = arith.constant 0 : i32
    %2 = arith.cmpi ne, %1, %c0_i32_0 : i32
    scf.if %2 {
      %c0_71 = arith.constant 0 : index
      %c0_72 = arith.constant 0 : index
      %153 = vector.load %arg2[%c0_71, %c0_72] : memref<16x32xf32, #tpu.memory_space<vmem>>, vector<16x32xf32>
      %c0_73 = arith.constant 0 : index
      %c0_74 = arith.constant 0 : index
      %154 = vector.load %arg11[%c0_73, %c0_74] : memref<16x32xf32, #tpu.memory_space<vmem>>, vector<16x32xf32>
      tpu.vector_store %arg11[%c0_73, %c0_74], %153 {strides = array<i32>} : memref<16x32xf32, #tpu.memory_space<vmem>>, vector<16x32xf32>,
    } else {
    }
    %c0 = arith.constant 0 : index
    %c0_1 = arith.constant 0 : index
    %3 = vector.load %arg11[%c0, %c0_1] : memref<16x32xf32, #tpu.memory_space<vmem>>, vector<16x32xf32>
    %c0_2 = arith.constant 0 : index
    %c0_3 = arith.constant 0 : index
    %c0_4 = arith.constant 0 : index
    %4 = vector.load %arg8[%c0_2, %c0_3, %c0_4] : memref<1x8x32xf32, #tpu.memory_space<vmem>>, vector<1x1x32xf32>
    %5 = vector.shape_cast %4 : vector<1x1x32xf32> to vector<1x32xf32>
    %c0_5 = arith.constant 0 : index
    %c1 = arith.constant 1 : index
    %c0_6 = arith.constant 0 : index
    %6 = vector.load %arg8[%c0_5, %c1, %c0_6] : memref<1x8x32xf32, #tpu.memory_space<vmem>>, vector<1x1x32xf32>
    %7 = vector.shape_cast %6 : vector<1x1x32xf32> to vector<1x32xf32>
    %c0_7 = arith.constant 0 : index
    %c2 = arith.constant 2 : index
    %c0_8 = arith.constant 0 : index
    %8 = vector.load %arg8[%c0_7, %c2, %c0_8] : memref<1x8x32xf32, #tpu.memory_space<vmem>>, vector<1x1x32xf32>
    %9 = vector.shape_cast %8 : vector<1x1x32xf32> to vector<1x32xf32>
    %c0_9 = arith.constant 0 : index
    %c3 = arith.constant 3 : index
    %c0_10 = arith.constant 0 : index
    %10 = vector.load %arg8[%c0_9, %c3, %c0_10] : memref<1x8x32xf32, #tpu.memory_space<vmem>>, vector<1x1x32xf32>
    %11 = vector.shape_cast %10 : vector<1x1x32xf32> to vector<1x32xf32>
    %c0_11 = arith.constant 0 : index
    %c4 = arith.constant 4 : index
    %c0_12 = arith.constant 0 : index
    %12 = vector.load %arg8[%c0_11, %c4, %c0_12] : memref<1x8x32xf32, #tpu.memory_space<vmem>>, vector<1x1x32xf32>
    %13 = vector.shape_cast %12 : vector<1x1x32xf32> to vector<1x32xf32>
    %c0_13 = arith.constant 0 : index
    %c5 = arith.constant 5 : index
    %c0_14 = arith.constant 0 : index
    %14 = vector.load %arg8[%c0_13, %c5, %c0_14] : memref<1x8x32xf32, #tpu.memory_space<vmem>>, vector<1x1x32xf32>
    %15 = vector.shape_cast %14 : vector<1x1x32xf32> to vector<1x32xf32>
    %c0_15 = arith.constant 0 : index
    %c6 = arith.constant 6 : index
    %c0_16 = arith.constant 0 : index
    %16 = vector.load %arg8[%c0_15, %c6, %c0_16] : memref<1x8x32xf32, #tpu.memory_space<vmem>>, vector<1x1x32xf32>
    %17 = vector.shape_cast %16 : vector<1x1x32xf32> to vector<1x32xf32>
    %c0_17 = arith.constant 0 : index
    %c0_18 = arith.constant 0 : index
    %c0_19 = arith.constant 0 : index
    %18 = vector.load %arg3[%c0_17, %c0_18, %c0_19] : memref<1x32x96xf32, #tpu.memory_space<vmem>>, vector<1x32x96xf32>
    %19 = vector.shape_cast %18 : vector<1x32x96xf32> to vector<32x96xf32>
    %cst = arith.constant dense<0.000000e+00> : vector<16x96xf32>
    %20 = tpu.matmul %3, %19, %cst {dimension_numbers = #tpu.dot_dimension_numbers<[1], [0], [0], [1], [0, 0, 1, 1], [], []>} : vector<16x32xf32>, vector<32x96xf32>, vector<16x96xf32> -> vector<16x96xf32>
    %21 = vector.extract_strided_slice %20 {offsets = [0, 0], sizes = [16, 32], strides = [1, 1]} : vector<16x96xf32> to vector<16x32xf32>
    %22 = vector.broadcast %5 : vector<1x32xf32> to vector<16x32xf32>
    %23 = arith.addf %21, %22 : vector<16x32xf32>
    %24 = vector.extract_strided_slice %20 {offsets = [0, 32], sizes = [16, 32], strides = [1, 1]} : vector<16x96xf32> to vector<16x32xf32>
    %25 = vector.broadcast %7 : vector<1x32xf32> to vector<16x32xf32>
    %26 = arith.addf %24, %25 : vector<16x32xf32>
    %27 = vector.extract_strided_slice %20 {offsets = [0, 64], sizes = [16, 32], strides = [1, 1]} : vector<16x96xf32> to vector<16x32xf32>
    %28 = vector.broadcast %9 : vector<1x32xf32> to vector<16x32xf32>
    %29 = arith.addf %27, %28 : vector<16x32xf32>
    %30 = vector.extract_strided_slice %23 {offsets = [0, 0], sizes = [8, 16], strides = [1, 1]} : vector<16x32xf32> to vector<8x16xf32>
    %31 = vector.extract_strided_slice %26 {offsets = [0, 0], sizes = [8, 16], strides = [1, 1]} : vector<16x32xf32> to vector<8x16xf32>
    %cst_20 = arith.constant dense<0.000000e+00> : vector<8x8xf32>
    %32 = tpu.matmul %30, %31, %cst_20 {dimension_numbers = #tpu.dot_dimension_numbers<[1], [1], [0], [0], [0, 0, 1, 0], [], []>} : vector<8x16xf32>, vector<8x16xf32>, vector<8x8xf32> -> vector<8x8xf32>
    %cst_21 = arith.constant dense<0xFF800000> : vector<8xf32>
    %33 = vector.multi_reduction <maximumf>, %32, %cst_21 [1] : vector<8x8xf32> to vector<8xf32>
    %34 = vector.shape_cast %33 : vector<8xf32> to vector<8x1xf32>
    %35 = vector.broadcast %34 : vector<8x1xf32> to vector<8x8xf32>
    %36 = arith.subf %32, %35 : vector<8x8xf32>
    %37 = math.exp %36 : vector<8x8xf32>
    %cst_22 = arith.constant dense<0.000000e+00> : vector<8xf32>
    %38 = vector.multi_reduction <add>, %37, %cst_22 [1] : vector<8x8xf32> to vector<8xf32>
    %39 = vector.shape_cast %38 : vector<8xf32> to vector<8x1xf32>
    %40 = tpu.reciprocal %39 {approx = true} : vector<8x1xf32> -> vector<8x1xf32>
    %41 = vector.broadcast %40 : vector<8x1xf32> to vector<8x8xf32>
    %42 = arith.mulf %37, %41 : vector<8x8xf32>
    %43 = vector.extract_strided_slice %29 {offsets = [0, 0], sizes = [8, 16], strides = [1, 1]} : vector<16x32xf32> to vector<8x16xf32>
    %cst_23 = arith.constant dense<0.000000e+00> : vector<8x16xf32>
    %44 = tpu.matmul %42, %43, %cst_23 {dimension_numbers = #tpu.dot_dimension_numbers<[1], [0], [0], [1], [0, 0, 1, 1], [], []>} : vector<8x8xf32>, vector<8x16xf32>, vector<8x16xf32> -> vector<8x16xf32>
    %c0_24 = arith.constant 0 : index
    %c0_25 = arith.constant 0 : index
    %45 = vector.load %arg12[%c0_24, %c0_25] : memref<16x32xf32, #tpu.memory_space<vmem>>, vector<8x16xf32>
    tpu.vector_store %arg12[%c0_24, %c0_25], %44 {strides = array<i32>} : memref<16x32xf32, #tpu.memory_space<vmem>>, vector<8x16xf32>,
    %46 = vector.extract_strided_slice %23 {offsets = [0, 16], sizes = [8, 16], strides = [1, 1]} : vector<16x32xf32> to vector<8x16xf32>
    %47 = vector.extract_strided_slice %26 {offsets = [0, 16], sizes = [8, 16], strides = [1, 1]} : vector<16x32xf32> to vector<8x16xf32>
    %cst_26 = arith.constant dense<0.000000e+00> : vector<8x8xf32>
    %48 = tpu.matmul %46, %47, %cst_26 {dimension_numbers = #tpu.dot_dimension_numbers<[1], [1], [0], [0], [0, 0, 1, 0], [], []>} : vector<8x16xf32>, vector<8x16xf32>, vector<8x8xf32> -> vector<8x8xf32>
    %cst_27 = arith.constant dense<0xFF800000> : vector<8xf32>
    %49 = vector.multi_reduction <maximumf>, %48, %cst_27 [1] : vector<8x8xf32> to vector<8xf32>
    %50 = vector.shape_cast %49 : vector<8xf32> to vector<8x1xf32>
    %51 = vector.broadcast %50 : vector<8x1xf32> to vector<8x8xf32>
    %52 = arith.subf %48, %51 : vector<8x8xf32>
    %53 = math.exp %52 : vector<8x8xf32>
    %cst_28 = arith.constant dense<0.000000e+00> : vector<8xf32>
    %54 = vector.multi_reduction <add>, %53, %cst_28 [1] : vector<8x8xf32> to vector<8xf32>
    %55 = vector.shape_cast %54 : vector<8xf32> to vector<8x1xf32>
    %56 = tpu.reciprocal %55 {approx = true} : vector<8x1xf32> -> vector<8x1xf32>
    %57 = vector.broadcast %56 : vector<8x1xf32> to vector<8x8xf32>
    %58 = arith.mulf %53, %57 : vector<8x8xf32>
    %59 = vector.extract_strided_slice %29 {offsets = [0, 16], sizes = [8, 16], strides = [1, 1]} : vector<16x32xf32> to vector<8x16xf32>
    %cst_29 = arith.constant dense<0.000000e+00> : vector<8x16xf32>
    %60 = tpu.matmul %58, %59, %cst_29 {dimension_numbers = #tpu.dot_dimension_numbers<[1], [0], [0], [1], [0, 0, 1, 1], [], []>} : vector<8x8xf32>, vector<8x16xf32>, vector<8x16xf32> -> vector<8x16xf32>
    %c0_30 = arith.constant 0 : index
    %c16 = arith.constant 16 : index
    %61 = vector.load %arg12[%c0_30, %c16] : memref<16x32xf32, #tpu.memory_space<vmem>>, vector<8x16xf32>
    tpu.vector_store %arg12[%c0_30, %c16], %60 {strides = array<i32>} : memref<16x32xf32, #tpu.memory_space<vmem>>, vector<8x16xf32>,
    %62 = vector.extract_strided_slice %23 {offsets = [8, 0], sizes = [8, 16], strides = [1, 1]} : vector<16x32xf32> to vector<8x16xf32>
    %63 = vector.extract_strided_slice %26 {offsets = [8, 0], sizes = [8, 16], strides = [1, 1]} : vector<16x32xf32> to vector<8x16xf32>
    %cst_31 = arith.constant dense<0.000000e+00> : vector<8x8xf32>
    %64 = tpu.matmul %62, %63, %cst_31 {dimension_numbers = #tpu.dot_dimension_numbers<[1], [1], [0], [0], [0, 0, 1, 0], [], []>} : vector<8x16xf32>, vector<8x16xf32>, vector<8x8xf32> -> vector<8x8xf32>
    %cst_32 = arith.constant dense<0xFF800000> : vector<8xf32>
    %65 = vector.multi_reduction <maximumf>, %64, %cst_32 [1] : vector<8x8xf32> to vector<8xf32>
    %66 = vector.shape_cast %65 : vector<8xf32> to vector<8x1xf32>
    %67 = vector.broadcast %66 : vector<8x1xf32> to vector<8x8xf32>
    %68 = arith.subf %64, %67 : vector<8x8xf32>
    %69 = math.exp %68 : vector<8x8xf32>
    %cst_33 = arith.constant dense<0.000000e+00> : vector<8xf32>
    %70 = vector.multi_reduction <add>, %69, %cst_33 [1] : vector<8x8xf32> to vector<8xf32>
    %71 = vector.shape_cast %70 : vector<8xf32> to vector<8x1xf32>
    %72 = tpu.reciprocal %71 {approx = true} : vector<8x1xf32> -> vector<8x1xf32>
    %73 = vector.broadcast %72 : vector<8x1xf32> to vector<8x8xf32>
    %74 = arith.mulf %69, %73 : vector<8x8xf32>
    %75 = vector.extract_strided_slice %29 {offsets = [8, 0], sizes = [8, 16], strides = [1, 1]} : vector<16x32xf32> to vector<8x16xf32>
    %cst_34 = arith.constant dense<0.000000e+00> : vector<8x16xf32>
    %76 = tpu.matmul %74, %75, %cst_34 {dimension_numbers = #tpu.dot_dimension_numbers<[1], [0], [0], [1], [0, 0, 1, 1], [], []>} : vector<8x8xf32>, vector<8x16xf32>, vector<8x16xf32> -> vector<8x16xf32>
    %c8 = arith.constant 8 : index
    %c0_35 = arith.constant 0 : index
    %77 = vector.load %arg12[%c8, %c0_35] : memref<16x32xf32, #tpu.memory_space<vmem>>, vector<8x16xf32>
    tpu.vector_store %arg12[%c8, %c0_35], %76 {strides = array<i32>} : memref<16x32xf32, #tpu.memory_space<vmem>>, vector<8x16xf32>,
    %78 = vector.extract_strided_slice %23 {offsets = [8, 16], sizes = [8, 16], strides = [1, 1]} : vector<16x32xf32> to vector<8x16xf32>
    %79 = vector.extract_strided_slice %26 {offsets = [8, 16], sizes = [8, 16], strides = [1, 1]} : vector<16x32xf32> to vector<8x16xf32>
    %cst_36 = arith.constant dense<0.000000e+00> : vector<8x8xf32>
    %80 = tpu.matmul %78, %79, %cst_36 {dimension_numbers = #tpu.dot_dimension_numbers<[1], [1], [0], [0], [0, 0, 1, 0], [], []>} : vector<8x16xf32>, vector<8x16xf32>, vector<8x8xf32> -> vector<8x8xf32>
    %cst_37 = arith.constant dense<0xFF800000> : vector<8xf32>
    %81 = vector.multi_reduction <maximumf>, %80, %cst_37 [1] : vector<8x8xf32> to vector<8xf32>
    %82 = vector.shape_cast %81 : vector<8xf32> to vector<8x1xf32>
    %83 = vector.broadcast %82 : vector<8x1xf32> to vector<8x8xf32>
    %84 = arith.subf %80, %83 : vector<8x8xf32>
    %85 = math.exp %84 : vector<8x8xf32>
    %cst_38 = arith.constant dense<0.000000e+00> : vector<8xf32>
    %86 = vector.multi_reduction <add>, %85, %cst_38 [1] : vector<8x8xf32> to vector<8xf32>
    %87 = vector.shape_cast %86 : vector<8xf32> to vector<8x1xf32>
    %88 = tpu.reciprocal %87 {approx = true} : vector<8x1xf32> -> vector<8x1xf32>
    %89 = vector.broadcast %88 : vector<8x1xf32> to vector<8x8xf32>
    %90 = arith.mulf %85, %89 : vector<8x8xf32>
    %91 = vector.extract_strided_slice %29 {offsets = [8, 16], sizes = [8, 16], strides = [1, 1]} : vector<16x32xf32> to vector<8x16xf32>
    %cst_39 = arith.constant dense<0.000000e+00> : vector<8x16xf32>
    %92 = tpu.matmul %90, %91, %cst_39 {dimension_numbers = #tpu.dot_dimension_numbers<[1], [0], [0], [1], [0, 0, 1, 1], [], []>} : vector<8x8xf32>, vector<8x16xf32>, vector<8x16xf32> -> vector<8x16xf32>
    %c8_40 = arith.constant 8 : index
    %c16_41 = arith.constant 16 : index
    %93 = vector.load %arg12[%c8_40, %c16_41] : memref<16x32xf32, #tpu.memory_space<vmem>>, vector<8x16xf32>
    tpu.vector_store %arg12[%c8_40, %c16_41], %92 {strides = array<i32>} : memref<16x32xf32, #tpu.memory_space<vmem>>, vector<8x16xf32>,
    %c0_42 = arith.constant 0 : index
    %c0_43 = arith.constant 0 : index
    %94 = vector.load %arg12[%c0_42, %c0_43] : memref<16x32xf32, #tpu.memory_space<vmem>>, vector<16x32xf32>
    %c0_44 = arith.constant 0 : index
    %c0_45 = arith.constant 0 : index
    %c0_46 = arith.constant 0 : index
    %95 = vector.load %arg4[%c0_44, %c0_45, %c0_46] : memref<1x32x32xf32, #tpu.memory_space<vmem>>, vector<1x32x32xf32>
    %96 = vector.shape_cast %95 : vector<1x32x32xf32> to vector<32x32xf32>
    %cst_47 = arith.constant dense<0.000000e+00> : vector<16x32xf32>
    %97 = tpu.matmul %94, %96, %cst_47 {dimension_numbers = #tpu.dot_dimension_numbers<[1], [0], [0], [1], [0, 0, 1, 1], [], []>} : vector<16x32xf32>, vector<32x32xf32>, vector<16x32xf32> -> vector<16x32xf32>
    %98 = vector.broadcast %11 : vector<1x32xf32> to vector<16x32xf32>
    %99 = arith.addf %97, %98 : vector<16x32xf32>
    %100 = arith.addf %3, %99 : vector<16x32xf32>
    %cst_48 = arith.constant dense<0.000000e+00> : vector<16xf32>
    %101 = vector.multi_reduction <add>, %100, %cst_48 [1] : vector<16x32xf32> to vector<16xf32>
    %102 = vector.shape_cast %101 : vector<16xf32> to vector<16x1xf32>
    %cst_49 = arith.constant 3.200000e+01 : f32
    %103 = vector.broadcast %cst_49 : f32 to vector<16x1xf32>
    %104 = arith.divf %102, %103 : vector<16x1xf32>
    %105 = vector.broadcast %104 : vector<16x1xf32> to vector<16x32xf32>
    %106 = arith.subf %100, %105 : vector<16x32xf32>
    %107 = arith.mulf %106, %106 : vector<16x32xf32>
    %cst_50 = arith.constant dense<0.000000e+00> : vector<16xf32>
    %108 = vector.multi_reduction <add>, %107, %cst_50 [1] : vector<16x32xf32> to vector<16xf32>
    %109 = vector.shape_cast %108 : vector<16xf32> to vector<16x1xf32>
    %cst_51 = arith.constant 3.200000e+01 : f32
    %110 = vector.broadcast %cst_51 : f32 to vector<16x1xf32>
    %111 = arith.divf %109, %110 : vector<16x1xf32>
    %112 = vector.broadcast %104 : vector<16x1xf32> to vector<16x32xf32>
    %113 = arith.subf %100, %112 : vector<16x32xf32>
    %cst_52 = arith.constant 9.99999974E-6 : f32
    %114 = vector.broadcast %cst_52 : f32 to vector<16x1xf32>
    %115 = arith.addf %111, %114 : vector<16x1xf32>
    %116 = math.rsqrt %115 : vector<16x1xf32>
    %117 = vector.broadcast %116 : vector<16x1xf32> to vector<16x32xf32>
    %118 = arith.mulf %113, %117 : vector<16x32xf32>
    %119 = vector.broadcast %13 : vector<1x32xf32> to vector<16x32xf32>
    %120 = arith.mulf %118, %119 : vector<16x32xf32>
    %121 = vector.broadcast %15 : vector<1x32xf32> to vector<16x32xf32>
    %122 = arith.addf %120, %121 : vector<16x32xf32>
    %c0_53 = arith.constant 0 : index
    %c0_54 = arith.constant 0 : index
    %c0_55 = arith.constant 0 : index
    %123 = vector.load %arg5[%c0_53, %c0_54, %c0_55] : memref<1x32x64xf32, #tpu.memory_space<vmem>>, vector<1x32x64xf32>
    %124 = vector.shape_cast %123 : vector<1x32x64xf32> to vector<32x64xf32>
    %cst_56 = arith.constant dense<0.000000e+00> : vector<16x64xf32>
    %125 = tpu.matmul %122, %124, %cst_56 {dimension_numbers = #tpu.dot_dimension_numbers<[1], [0], [0], [1], [0, 0, 1, 1], [], []>} : vector<16x32xf32>, vector<32x64xf32>, vector<16x64xf32> -> vector<16x64xf32>
    %c0_57 = arith.constant 0 : index
    %c0_58 = arith.constant 0 : index
    %c0_59 = arith.constant 0 : index
    %126 = vector.load %arg6[%c0_57, %c0_58, %c0_59] : memref<1x1x64xf32, #tpu.memory_space<vmem>>, vector<1x1x64xf32>
    %127 = vector.shape_cast %126 : vector<1x1x64xf32> to vector<1x64xf32>
    %128 = vector.broadcast %127 : vector<1x64xf32> to vector<16x64xf32>
    %129 = arith.addf %125, %128 : vector<16x64xf32>
    %cst_60 = arith.constant 5.000000e-01 : f32
    %130 = vector.broadcast %cst_60 : f32 to vector<16x64xf32>
    %131 = arith.mulf %130, %129 : vector<16x64xf32>
    %cst_61 = arith.constant 4.471500e-02 : f32
    %132 = vector.broadcast %cst_61 : f32 to vector<16x64xf32>
    %133 = arith.mulf %132, %129 : vector<16x64xf32>
    %134 = arith.mulf %133, %129 : vector<16x64xf32>
    %135 = arith.mulf %134, %129 : vector<16x64xf32>
    %136 = arith.addf %129, %135 : vector<16x64xf32>
    %cst_62 = arith.constant 0.797884583 : f32
    %137 = vector.broadcast %cst_62 : f32 to vector<16x64xf32>
    %138 = arith.mulf %137, %136 : vector<16x64xf32>
    %139 = math.tanh %138 : vector<16x64xf32>
    %cst_63 = arith.constant 1.000000e+00 : f32
    %140 = vector.broadcast %cst_63 : f32 to vector<16x64xf32>
    %141 = arith.addf %140, %139 : vector<16x64xf32>
    %142 = arith.mulf %131, %141 : vector<16x64xf32>
    %c0_64 = arith.constant 0 : index
    %c0_65 = arith.constant 0 : index
    %c0_66 = arith.constant 0 : index
    %143 = vector.load %arg7[%c0_64, %c0_65, %c0_66] : memref<1x64x32xf32, #tpu.memory_space<vmem>>, vector<1x64x32xf32>
    %144 = vector.shape_cast %143 : vector<1x64x32xf32> to vector<64x32xf32>
    %cst_67 = arith.constant dense<0.000000e+00> : vector<16x32xf32>
    %145 = tpu.matmul %142, %144, %cst_67 {dimension_numbers = #tpu.dot_dimension_numbers<[1], [0], [0], [1], [0, 0, 1, 1], [], []>} : vector<16x64xf32>, vector<64x32xf32>, vector<16x32xf32> -> vector<16x32xf32>
    %146 = vector.broadcast %17 : vector<1x32xf32> to vector<16x32xf32>
    %147 = arith.addf %145, %146 : vector<16x32xf32>
    %148 = arith.addf %100, %147 : vector<16x32xf32>
    %c0_68 = arith.constant 0 : index
    %c0_69 = arith.constant 0 : index
    %149 = vector.load %arg11[%c0_68, %c0_69] : memref<16x32xf32, #tpu.memory_space<vmem>>, vector<16x32xf32>
    tpu.vector_store %arg11[%c0_68, %c0_69], %148 {strides = array<i32>} : memref<16x32xf32, #tpu.memory_space<vmem>>, vector<16x32xf32>,
    %c1_i32 = arith.constant 1 : i32
    %150 = arith.cmpi eq, %arg1, %c1_i32 : i32
    %151 = arith.extui %150 : i1 to i32
    %c0_i32_70 = arith.constant 0 : i32
    %152 = arith.cmpi ne, %151, %c0_i32_70 : i32
    scf.if %152 {
      %c0_71 = arith.constant 0 : index
      %c0_72 = arith.constant 0 : index
      %153 = vector.load %arg9[%c0_71, %c0_72] : memref<8x32xf32, #tpu.memory_space<vmem>>, vector<1x32xf32>
      %c1_73 = arith.constant 1 : index
      %c0_74 = arith.constant 0 : index
      %154 = vector.load %arg9[%c1_73, %c0_74] : memref<8x32xf32, #tpu.memory_space<vmem>>, vector<1x32xf32>
      %cst_75 = arith.constant dense<0.000000e+00> : vector<16xf32>
      %155 = vector.multi_reduction <add>, %148, %cst_75 [1] : vector<16x32xf32> to vector<16xf32>
      %156 = vector.shape_cast %155 : vector<16xf32> to vector<16x1xf32>
      %cst_76 = arith.constant 3.200000e+01 : f32
      %157 = vector.broadcast %cst_76 : f32 to vector<16x1xf32>
      %158 = arith.divf %156, %157 : vector<16x1xf32>
      %159 = vector.broadcast %158 : vector<16x1xf32> to vector<16x32xf32>
      %160 = arith.subf %148, %159 : vector<16x32xf32>
      %161 = arith.mulf %160, %160 : vector<16x32xf32>
      %cst_77 = arith.constant dense<0.000000e+00> : vector<16xf32>
      %162 = vector.multi_reduction <add>, %161, %cst_77 [1] : vector<16x32xf32> to vector<16xf32>
      %163 = vector.shape_cast %162 : vector<16xf32> to vector<16x1xf32>
      %cst_78 = arith.constant 3.200000e+01 : f32
      %164 = vector.broadcast %cst_78 : f32 to vector<16x1xf32>
      %165 = arith.divf %163, %164 : vector<16x1xf32>
      %166 = vector.broadcast %158 : vector<16x1xf32> to vector<16x32xf32>
      %167 = arith.subf %148, %166 : vector<16x32xf32>
      %cst_79 = arith.constant 9.99999974E-6 : f32
      %168 = vector.broadcast %cst_79 : f32 to vector<16x1xf32>
      %169 = arith.addf %165, %168 : vector<16x1xf32>
      %170 = math.rsqrt %169 : vector<16x1xf32>
      %171 = vector.broadcast %170 : vector<16x1xf32> to vector<16x32xf32>
      %172 = arith.mulf %167, %171 : vector<16x32xf32>
      %173 = vector.broadcast %153 : vector<1x32xf32> to vector<16x32xf32>
      %174 = arith.mulf %172, %173 : vector<16x32xf32>
      %175 = vector.broadcast %154 : vector<1x32xf32> to vector<16x32xf32>
      %176 = arith.addf %174, %175 : vector<16x32xf32>
      %c0_80 = arith.constant 0 : index
      %c0_81 = arith.constant 0 : index
      %177 = vector.load %arg10[%c0_80, %c0_81] : memref<16x32xf32, #tpu.memory_space<vmem>>, vector<16x32xf32>
      tpu.vector_store %arg10[%c0_80, %c0_81], %176 {strides = array<i32>} : memref<16x32xf32, #tpu.memory_space<vmem>>, vector<16x32xf32>,
    } else {
    }
    return
  }
  func.func @transform_0(%arg0: i32, %arg1: i32) -> (i32, i32) {
    %c0_i32 = arith.constant 0 : i32
    %c0_i32_0 = arith.constant 0 : i32
    return %arg0, %c0_i32 : i32, i32
  }
  func.func @transform_1(%arg0: i32, %arg1: i32) -> (i32, i32, i32) {
    %c0_i32 = arith.constant 0 : i32
    %c0_i32_0 = arith.constant 0 : i32
    %c0_i32_1 = arith.constant 0 : i32
    return %arg1, %c0_i32, %c0_i32_0 : i32, i32, i32
  }
  func.func @transform_2(%arg0: i32, %arg1: i32) -> (i32, i32, i32) {
    %c0_i32 = arith.constant 0 : i32
    %c0_i32_0 = arith.constant 0 : i32
    %c0_i32_1 = arith.constant 0 : i32
    return %arg1, %c0_i32, %c0_i32_0 : i32, i32, i32
  }
  func.func @transform_3(%arg0: i32, %arg1: i32) -> (i32, i32, i32) {
    %c0_i32 = arith.constant 0 : i32
    %c0_i32_0 = arith.constant 0 : i32
    %c0_i32_1 = arith.constant 0 : i32
    return %arg1, %c0_i32, %c0_i32_0 : i32, i32, i32
  }
  func.func @transform_4(%arg0: i32, %arg1: i32) -> (i32, i32, i32) {
    %c0_i32 = arith.constant 0 : i32
    %c0_i32_0 = arith.constant 0 : i32
    %c0_i32_1 = arith.constant 0 : i32
    return %arg1, %c0_i32, %c0_i32_0 : i32, i32, i32
  }
  func.func @transform_5(%arg0: i32, %arg1: i32) -> (i32, i32, i32) {
    %c0_i32 = arith.constant 0 : i32
    %c0_i32_0 = arith.constant 0 : i32
    %c0_i32_1 = arith.constant 0 : i32
    return %arg1, %c0_i32, %c0_i32_0 : i32, i32, i32
  }
  func.func @transform_6(%arg0: i32, %arg1: i32) -> (i32, i32, i32) {
    %c0_i32 = arith.constant 0 : i32
    %c0_i32_0 = arith.constant 0 : i32
    %c0_i32_1 = arith.constant 0 : i32
    return %arg1, %c0_i32, %c0_i32_0 : i32, i32, i32
  }
  func.func @transform_7(%arg0: i32, %arg1: i32) -> (i32, i32) {
    %c0_i32 = arith.constant 0 : i32
    %c0_i32_0 = arith.constant 0 : i32
    %c0_i32_1 = arith.constant 0 : i32
    return %c0_i32, %c0_i32_0 : i32, i32
  }
  func.func @transform_8(%arg0: i32, %arg1: i32) -> (i32, i32) {
    %c0_i32 = arith.constant 0 : i32
    %c0_i32_0 = arith.constant 0 : i32
    return %arg0, %c0_i32 : i32, i32
  }
}

</mosaic_0001>

<llo_original>
// kernel: tpu_custom_call.1
$region0: #{tpu_custom_call.1}
  #allocation0 [shape = 'u32[]', space=smem, size = 0x4, offset = 0x4, fixed_abs, tag = 'smem constant byte address 0x4 - core index']
  #allocation1 [shape = 'u32[144,128]{1,0:T(1,128)}', space=vmem, size = 0x12000, scoped, tag = 'internal scratch']
  #allocation2 [shape = 'f32[16,32]{1,0:T(8,128)}', space=vmem, size = 0x2000, scoped, tag = 'scratch operand']
  #allocation3 [shape = 'f32[16,32]{1,0:T(8,128)}', space=vmem, size = 0x2000, scoped, tag = 'scratch operand']
  %s0 = inlined_call_operand.hbm [shape: f32[16,32], index: 0, kind: input, shape index: {}]
  %s1 = inlined_call_operand.vmem [shape: f32[2,32,96], index: 1, kind: input, shape index: {}]
  %s2 = inlined_call_operand.vmem [shape: f32[2,32,32], index: 2, kind: input, shape index: {}]
  %s3 = inlined_call_operand.vmem [shape: f32[2,32,64], index: 3, kind: input, shape index: {}]
  %s4 = inlined_call_operand.vmem [shape: f32[2,1,64], index: 4, kind: input, shape index: {}]
  %s5 = inlined_call_operand.vmem [shape: f32[2,64,32], index: 5, kind: input, shape index: {}]
  %s6 = inlined_call_operand.hbm [shape: f32[2,8,32], index: 6, kind: input, shape index: {}]
  %s7 = inlined_call_operand.vmem [shape: f32[8,32], index: 7, kind: input, shape index: {}]
  %s8 = inlined_call_operand.hbm [shape: f32[16,32], index: 8, kind: output, shape index: {}]
  %s9 = sld [smem:[#allocation0]]
  $region81: #{tpu_custom_call.1} parent=0
    _
  %s11 = ssub.s32 1, %s9
  %s12 = scalar_select 0, %s11, %s9
  $region1: #{tpu_custom_call.1} parent=0
    #allocation4 [shape = 'u8[8192]{0}', space=vmem, size = 0x2000, scoped, tag = 'input window, operand 0, single buffered']
    #allocation5 [shape = 's32[2]{0}', space=sflag, size = 0x8, scoped, tag = 'scoped memory for tpu_custom_call.1']
    #allocation6 [shape = 's32[2]{0}', space=sflag, size = 0x8, scoped, tag = 'scoped memory for tpu_custom_call.1']
    #allocation7 [shape = 'u8[8192]{0}', space=vmem, size = 0x2000, scoped, tag = 'input window, operand 6']
    #allocation8 [shape = 's32[2]{0}', space=sflag, size = 0x8, scoped, tag = 'scoped memory for tpu_custom_call.1']
    #allocation9 [shape = 'u8[8192]{0}', space=vmem, size = 0x2000, scoped, tag = 'output window, operand 0, single buffered']
    %13 = vsyncpa [#allocation5], 0
    %14 = vsyncpa [#allocation8], 0
    %s15 = scalar_lea.sflag [#allocation8], 1
    %16 = vsyncpa %s15, 0
    %17 = vsyncpa [#allocation6], 0
    loop: start=0, step=1, limit=4
    $region2: #{tpu_custom_call.1} parent=1 // loop_pre_header
      _
    $region3: #{tpu_custom_call.1} parent=1 // loop_header
      %s19 = sphi 0, %s23
      %p20 = scmp.ge.s32.totalorder %s19, 4
      %s26 = sphi 0, %s38
      %s27 = sphi 0, %s34
      %s28 = sphi 0, %s26
      %s29 = sphi 0, %s27
      %s30 = sphi 0, %s28
      %s31 = sphi 0, %s29
      %s41 = sphi 0, %s43
      %s44 = sphi 0, %s41
      %s45 = sphi 0, %s44
      %s61 = sphi 0, %s45
      %s67 = sphi 0, %s69
      %s70 = sphi 0, %s67
      %s71 = sphi 0, %s70
      %s87 = sphi 0, %s71
      %s93 = sphi 0, %s95
      %s96 = sphi 0, %s93
      %s97 = sphi 0, %s96
      %s113 = sphi 0, %s97
      %s119 = sphi 0, %s121
      %s122 = sphi 0, %s119
      %s123 = sphi 0, %s122
      %s139 = sphi 0, %s123
      %s145 = sphi 0, %s147
      %s148 = sphi 0, %s145
      %s149 = sphi 0, %s148
      %s165 = sphi 0, %s149
      %s171 = sphi 0, %s173
      %s174 = sphi 0, %s171
      %s175 = sphi 0, %s174
      %s191 = sphi 0, %s175
      %s197 = sphi 0, %s199
      %s200 = sphi 0, %s197
      %s201 = sphi 0, %s200
      %s217 = sphi 0, %s201
      %s221 = sphi 0, %s221
      %s223 = sphi 0, %s221
      %s224 = sphi 0, %s223
      %s238 = sphi 0, %s224
      %s244 = sphi 0, %s246
      %s247 = sphi 0, %s244
      %s248 = sphi 0, %s247
      %s264 = sphi 0, %s248
    $region4: #{tpu_custom_call.1} parent=1 // loop_header_branch
      %22 = sbr.rel (%p20) target = $region8
    $region5: #{tpu_custom_call.1} parent=1 // loop_body
      %s24 = ssub.s32 %s19, 1
      %s25 = ssub.s32 %s19, 2
      %s32 = sadd.s32 1, %s27
      %p33 = scmp.ge.s32.totalorder %s32, 2
      %s34 = scalar_select %p33, 0, %s32
      %s35 = sadd.s32 1, %s26
      %s36 = scalar_select %p33, %s35, %s26
      %p37 = scmp.ge.s32.totalorder %s36, 1
      %s38 = scalar_select %p37, 0, %s36
      %s39 = ssub.s32 %s26, %s38
      %p40 = scmp.eq.s32.totalorder %s39, 0
      %s42 = sadd.s32 %s41, 1
      %s43 = scalar_select %p40, %s41, %s42
      %p46 = pneg %p40
      %p47 = scmp.eq.s32.totalorder %s19, 1
      %p48 = por %p46, %p47
      %p49 = scmp.ne.s32.totalorder %s41, %s44
      %p50 = scmp.eq.s32.totalorder %s19, 0
      %p51 = por %p49, %p50
      %p52 = scmp.ne.s32.totalorder %s41, %s44
      %p53 = scmp.eq.s32.totalorder %s24, 1
      %p54 = por %p52, %p53
      %p55 = scmp.ne.s32.totalorder %s44, %s45
      %p56 = scmp.eq.s32.totalorder %s24, 0
      %p57 = por %p55, %p56
      %p58 = scmp.ne.s32.totalorder %s44, %s45
      %p59 = scmp.eq.s32.totalorder %s25, 1
      %p60 = por %p58, %p59
      %p62 = scmp.ne.s32.totalorder %s45, %s61
      %p63 = scmp.eq.s32.totalorder %s25, 0
      %p64 = por %p62, %p63
      %s65 = ssub.s32 %s27, %s34
      %p66 = scmp.eq.s32.totalorder %s65, 0
      %s68 = sadd.s32 %s67, 1
      %s69 = scalar_select %p66, %s67, %s68
      %p72 = pneg %p66
      %p73 = scmp.eq.s32.totalorder %s19, 1
      %p74 = por %p72, %p73
      %p75 = scmp.ne.s32.totalorder %s67, %s70
      %p76 = scmp.eq.s32.totalorder %s19, 0
      %p77 = por %p75, %p76
      %p78 = scmp.ne.s32.totalorder %s67, %s70
      %p79 = scmp.eq.s32.totalorder %s24, 1
      %p80 = por %p78, %p79
      %p81 = scmp.ne.s32.totalorder %s70, %s71
      %p82 = scmp.eq.s32.totalorder %s24, 0
      %p83 = por %p81, %p82
      %p84 = scmp.ne.s32.totalorder %s70, %s71
      %p85 = scmp.eq.s32.totalorder %s25, 1
      %p86 = por %p84, %p85
      %p88 = scmp.ne.s32.totalorder %s71, %s87
      %p89 = scmp.eq.s32.totalorder %s25, 0
      %p90 = por %p88, %p89
      %s91 = ssub.s32 %s27, %s34
      %p92 = scmp.eq.s32.totalorder %s91, 0
      %s94 = sadd.s32 %s93, 1
      %s95 = scalar_select %p92, %s93, %s94
      %p98 = pneg %p92
      %p99 = scmp.eq.s32.totalorder %s19, 1
      %p100 = por %p98, %p99
      %p101 = scmp.ne.s32.totalorder %s93, %s96
      %p102 = scmp.eq.s32.totalorder %s19, 0
      %p103 = por %p101, %p102
      %p104 = scmp.ne.s32.totalorder %s93, %s96
      %p105 = scmp.eq.s32.totalorder %s24, 1
      %p106 = por %p104, %p105
      %p107 = scmp.ne.s32.totalorder %s96, %s97
      %p108 = scmp.eq.s32.totalorder %s24, 0
      %p109 = por %p107, %p108
      %p110 = scmp.ne.s32.totalorder %s96, %s97
      %p111 = scmp.eq.s32.totalorder %s25, 1
      %p112 = por %p110, %p111
      %p114 = scmp.ne.s32.totalorder %s97, %s113
      %p115 = scmp.eq.s32.totalorder %s25, 0
      %p116 = por %p114, %p115
      %s117 = ssub.s32 %s27, %s34
      %p118 = scmp.eq.s32.totalorder %s117, 0
      %s120 = sadd.s32 %s119, 1
      %s121 = scalar_select %p118, %s119, %s120
      %p124 = pneg %p118
      %p125 = scmp.eq.s32.totalorder %s19, 1
      %p126 = por %p124, %p125
      %p127 = scmp.ne.s32.totalorder %s119, %s122
      %p128 = scmp.eq.s32.totalorder %s19, 0
      %p129 = por %p127, %p128
      %p130 = scmp.ne.s32.totalorder %s119, %s122
      %p131 = scmp.eq.s32.totalorder %s24, 1
      %p132 = por %p130, %p131
      %p133 = scmp.ne.s32.totalorder %s122, %s123
      %p134 = scmp.eq.s32.totalorder %s24, 0
      %p135 = por %p133, %p134
      %p136 = scmp.ne.s32.totalorder %s122, %s123
      %p137 = scmp.eq.s32.totalorder %s25, 1
      %p138 = por %p136, %p137
      %p140 = scmp.ne.s32.totalorder %s123, %s139
      %p141 = scmp.eq.s32.totalorder %s25, 0
      %p142 = por %p140, %p141
      %s143 = ssub.s32 %s27, %s34
      %p144 = scmp.eq.s32.totalorder %s143, 0
      %s146 = sadd.s32 %s145, 1
      %s147 = scalar_select %p144, %s145, %s146
      %p150 = pneg %p144
      %p151 = scmp.eq.s32.totalorder %s19, 1
      %p152 = por %p150, %p151
      %p153 = scmp.ne.s32.totalorder %s145, %s148
      %p154 = scmp.eq.s32.totalorder %s19, 0
      %p155 = por %p153, %p154
      %p156 = scmp.ne.s32.totalorder %s145, %s148
      %p157 = scmp.eq.s32.totalorder %s24, 1
      %p158 = por %p156, %p157
      %p159 = scmp.ne.s32.totalorder %s148, %s149
      %p160 = scmp.eq.s32.totalorder %s24, 0
      %p161 = por %p159, %p160
      %p162 = scmp.ne.s32.totalorder %s148, %s149
      %p163 = scmp.eq.s32.totalorder %s25, 1
      %p164 = por %p162, %p163
      %p166 = scmp.ne.s32.totalorder %s149, %s165
      %p167 = scmp.eq.s32.totalorder %s25, 0
      %p168 = por %p166, %p167
      %s169 = ssub.s32 %s27, %s34
      %p170 = scmp.eq.s32.totalorder %s169, 0
      %s172 = sadd.s32 %s171, 1
      %s173 = scalar_select %p170, %s171, %s172
      %p176 = pneg %p170
      %p177 = scmp.eq.s32.totalorder %s19, 1
      %p178 = por %p176, %p177
      %p179 = scmp.ne.s32.totalorder %s171, %s174
      %p180 = scmp.eq.s32.totalorder %s19, 0
      %p181 = por %p179, %p180
      %p182 = scmp.ne.s32.totalorder %s171, %s174
      %p183 = scmp.eq.s32.totalorder %s24, 1
      %p184 = por %p182, %p183
      %p185 = scmp.ne.s32.totalorder %s174, %s175
      %p186 = scmp.eq.s32.totalorder %s24, 0
      %p187 = por %p185, %p186
      %p188 = scmp.ne.s32.totalorder %s174, %s175
      %p189 = scmp.eq.s32.totalorder %s25, 1
      %p190 = por %p188, %p189
      %p192 = scmp.ne.s32.totalorder %s175, %s191
      %p193 = scmp.eq.s32.totalorder %s25, 0
      %p194 = por %p192, %p193
      %s195 = ssub.s32 %s27, %s34
      %p196 = scmp.eq.s32.totalorder %s195, 0
      %s198 = sadd.s32 %s197, 1
      %s199 = scalar_select %p196, %s197, %s198
      %p202 = pneg %p196
      %p203 = scmp.eq.s32.totalorder %s19, 1
      %p204 = por %p202, %p203
      %p205 = scmp.ne.s32.totalorder %s197, %s200
      %p206 = scmp.eq.s32.totalorder %s19, 0
      %p207 = por %p205, %p206
      %p208 = scmp.ne.s32.totalorder %s197, %s200
      %p209 = scmp.eq.s32.totalorder %s24, 1
      %p210 = por %p208, %p209
      %p211 = scmp.ne.s32.totalorder %s200, %s201
      %p212 = scmp.eq.s32.totalorder %s24, 0
      %p213 = por %p211, %p212
      %p214 = scmp.ne.s32.totalorder %s200, %s201
      %p215 = scmp.eq.s32.totalorder %s25, 1
      %p216 = por %p214, %p215
      %p218 = scmp.ne.s32.totalorder %s201, %s217
      %p219 = scmp.eq.s32.totalorder %s25, 0
      %p220 = por %p218, %p219
      %s222 = sadd.s32 %s221, 1
      %p225 = scmp.eq.s32.totalorder %s19, 1
      %p226 = scmp.ne.s32.totalorder %s221, %s223
      %p227 = scmp.eq.s32.totalorder %s19, 0
      %p228 = por %p226, %p227
      %p229 = scmp.ne.s32.totalorder %s221, %s223
      %p230 = scmp.eq.s32.totalorder %s24, 1
      %p231 = por %p229, %p230
      %p232 = scmp.ne.s32.totalorder %s223, %s224
      %p233 = scmp.eq.s32.totalorder %s24, 0
      %p234 = por %p232, %p233
      %p235 = scmp.ne.s32.totalorder %s223, %s224
      %p236 = scmp.eq.s32.totalorder %s25, 1
      %p237 = por %p235, %p236
      %p239 = scmp.ne.s32.totalorder %s224, %s238
      %p240 = scmp.eq.s32.totalorder %s25, 0
      %p241 = por %p239, %p240
      %s242 = ssub.s32 %s26, %s38
      %p243 = scmp.eq.s32.totalorder %s242, 0
      %s245 = sadd.s32 %s244, 1
      %s246 = scalar_select %p243, %s244, %s245
      %p249 = pneg %p243
      %p250 = scmp.eq.s32.totalorder %s19, 1
      %p251 = por %p249, %p250
      %p252 = scmp.ne.s32.totalorder %s244, %s247
      %p253 = scmp.eq.s32.totalorder %s19, 0
      %p254 = por %p252, %p253
      %p255 = scmp.ne.s32.totalorder %s244, %s247
      %p256 = scmp.eq.s32.totalorder %s24, 1
      %p257 = por %p255, %p256
      %p258 = scmp.ne.s32.totalorder %s247, %s248
      %p259 = scmp.eq.s32.totalorder %s24, 0
      %p260 = por %p258, %p259
      %p261 = scmp.ne.s32.totalorder %s247, %s248
      %p262 = scmp.eq.s32.totalorder %s25, 1
      %p263 = por %p261, %p262
      %p265 = scmp.ne.s32.totalorder %s248, %s264
      %p266 = scmp.eq.s32.totalorder %s25, 0
      %p267 = por %p265, %p266
      %p268 = scmp.le.s32.totalorder 1, %s19
      %p269 = scmp.lt.s32.totalorder %s19, 3
      %p270 = pnand %p268, %p269
      %p271 = pneg %p270
      // Predicated region
      $region9: #{tpu_custom_call.1} parent=5 // pred_check
        _
      $region10: #{tpu_custom_call.1} parent=5 // pred_check_branch
        %273 = sbr.rel (%p270) target = $region12
      $region11: #{tpu_custom_call.1} parent=5 // pred_region
        %s274 = ssub.s32 %s19, 1
        // Predicated region
        $region13: #{tpu_custom_call.1} parent=11 // pred_check
          %p275 = pneg %p57
        $region14: #{tpu_custom_call.1} parent=11 // pred_check_branch
          %277 = sbr.rel (%p275) target = $region16
        $region15: #{tpu_custom_call.1} parent=11 // pred_region
          %s278 = smul.u32 2, %s28
          %s280 = ssub.s32 256, 256
          %281 = vsyncadd [#allocation5], %s280
          %s282 = smul.addr %s278, 128
          %s283 = scalar_lea.hbm %s0, %s282
          %s284 = sshll.u32 [#allocation4], 4
          %s285 = int_to_ptr.vmem [resolvable:$true] %s284
          %290 = dma.hbm_to_vmem [thread:$0]  %s283, 256, %s285, [#allocation5], 128, 128, 8
        $region16: #{tpu_custom_call.1} parent=11 // pred_fallthru
          _
        // Predicated region
        $region17: #{tpu_custom_call.1} parent=11 // pred_check
          %p291 = pneg %p234
        $region18: #{tpu_custom_call.1} parent=11 // pred_check_branch
          %293 = sbr.rel (%p291) target = $region20
        $region19: #{tpu_custom_call.1} parent=11 // pred_region
          _
        $region20: #{tpu_custom_call.1} parent=11 // pred_fallthru
          _
      $region12: #{tpu_custom_call.1} parent=5 // pred_fallthru
        _
      %p294 = scmp.lt.s32.totalorder %s19, 2
      // Predicated region
      $region21: #{tpu_custom_call.1} parent=5 // pred_check
        %p295 = pneg %p294
      $region22: #{tpu_custom_call.1} parent=5 // pred_check_branch
        %297 = sbr.rel (%p295) target = $region24
      $region23: #{tpu_custom_call.1} parent=5 // pred_region
        // Predicated region
        $region25: #{tpu_custom_call.1} parent=23 // pred_check
          %p298 = pneg %p77
        $region26: #{tpu_custom_call.1} parent=23 // pred_check_branch
          %300 = sbr.rel (%p298) target = $region28
        $region27: #{tpu_custom_call.1} parent=23 // pred_region
          %p301 = scmp.lt.s32.totalorder %s27, 1
          %s302 = scalar_select %p301, %s27, 1
          %s303 = smul.addr %s302, 4
          %s304 = smul.addr %s303, 8
          %s305 = scalar_lea.vmem %s1, %s304
        $region28: #{tpu_custom_call.1} parent=23 // pred_fallthru
          _
        // Predicated region
        $region29: #{tpu_custom_call.1} parent=23 // pred_check
          %p306 = pneg %p103
        $region30: #{tpu_custom_call.1} parent=23 // pred_check_branch
          %308 = sbr.rel (%p306) target = $region32
        $region31: #{tpu_custom_call.1} parent=23 // pred_region
          %p309 = scmp.lt.s32.totalorder %s27, 1
          %s310 = scalar_select %p309, %s27, 1
          %s311 = smul.addr %s310, 4
          %s312 = smul.addr %s311, 8
          %s313 = scalar_lea.vmem %s2, %s312
        $region32: #{tpu_custom_call.1} parent=23 // pred_fallthru
          _
        // Predicated region
        $region33: #{tpu_custom_call.1} parent=23 // pred_check
          %p314 = pneg %p129
        $region34: #{tpu_custom_call.1} parent=23 // pred_check_branch
          %316 = sbr.rel (%p314) target = $region36
        $region35: #{tpu_custom_call.1} parent=23 // pred_region
          %p317 = scmp.lt.s32.totalorder %s27, 1
          %s318 = scalar_select %p317, %s27, 1
          %s319 = smul.addr %s318, 4
          %s320 = smul.addr %s319, 8
          %s321 = scalar_lea.vmem %s3, %s320
        $region36: #{tpu_custom_call.1} parent=23 // pred_fallthru
          _
        // Predicated region
        $region37: #{tpu_custom_call.1} parent=23 // pred_check
          %p322 = pneg %p155
        $region38: #{tpu_custom_call.1} parent=23 // pred_check_branch
          %324 = sbr.rel (%p322) target = $region40
        $region39: #{tpu_custom_call.1} parent=23 // pred_region
          %p325 = scmp.lt.s32.totalorder %s27, 1
          %s326 = scalar_select %p325, %s27, 1
          %s327 = scalar_lea.vmem %s4, %s326
        $region40: #{tpu_custom_call.1} parent=23 // pred_fallthru
          _
        // Predicated region
        $region41: #{tpu_custom_call.1} parent=23 // pred_check
          %p328 = pneg %p181
        $region42: #{tpu_custom_call.1} parent=23 // pred_check_branch
          %330 = sbr.rel (%p328) target = $region44
        $region43: #{tpu_custom_call.1} parent=23 // pred_region
          %p331 = scmp.lt.s32.totalorder %s27, 1
          %s332 = scalar_select %p331, %s27, 1
          %s333 = smul.addr %s332, 8
          %s334 = smul.addr %s333, 8
          %s335 = scalar_lea.vmem %s5, %s334
        $region44: #{tpu_custom_call.1} parent=23 // pred_fallthru
          _
        // Predicated region
        $region45: #{tpu_custom_call.1} parent=23 // pred_check
          %p336 = pneg %p207
        $region46: #{tpu_custom_call.1} parent=23 // pred_check_branch
          %338 = sbr.rel (%p336) target = $region48
        $region47: #{tpu_custom_call.1} parent=23 // pred_region
          %s339 = sand.u32 %s197, 1
          %s340 = scalar_lea.sflag [#allocation8], %s339
          %s341 = sand.u32 %s197, 1
          %s342 = smul.addr %s341, 8
          %s343 = scalar_lea.vmem [#allocation7], %s342
          %s345 = ssub.s32 128, 128
          %346 = vsyncadd %s340, %s345
          %s347 = smul.addr %s27, 128
          %s348 = scalar_lea.hbm %s6, %s347
          %s350 = sshll.u32 %s343, 4
          %s351 = int_to_ptr.vmem [resolvable:$true] %s350
          %353 = dma.hbm_to_vmem [thread:$0]  %s348, 128, %s351, %s340
        $region48: #{tpu_custom_call.1} parent=23 // pred_fallthru
          _
      $region24: #{tpu_custom_call.1} parent=5 // pred_fallthru
        _
      %p354 = scmp.le.s32.totalorder 1, %s19
      %p355 = scmp.lt.s32.totalorder %s19, 3
      %p356 = pnand %p354, %p355
      %p357 = pneg %p356
      // Predicated region
      $region49: #{tpu_custom_call.1} parent=5 // pred_check
        _
      $region50: #{tpu_custom_call.1} parent=5 // pred_check_branch
        %359 = sbr.rel (%p356) target = $region52
      $region51: #{tpu_custom_call.1} parent=5 // pred_region
        %s360 = ssub.s32 %s19, 1
        // Predicated region
        $region53: #{tpu_custom_call.1} parent=51 // pred_check
          %p361 = pneg %p57
        $region54: #{tpu_custom_call.1} parent=51 // pred_check_branch
          %363 = sbr.rel (%p361) target = $region56
        $region55: #{tpu_custom_call.1} parent=51 // pred_region
          %364 = dma.done [#allocation5], 256
        $region56: #{tpu_custom_call.1} parent=51 // pred_fallthru
          _
        %s365 = sand.u32 %s200, 1
        %s366 = scalar_lea.sflag [#allocation8], %s365
        %s367 = sand.u32 %s200, 1
        %s368 = smul.addr %s367, 8
        %s369 = scalar_lea.vmem [#allocation7], %s368
        // Predicated region
        $region57: #{tpu_custom_call.1} parent=51 // pred_check
          %p370 = pneg %p213
        $region58: #{tpu_custom_call.1} parent=51 // pred_check_branch
          %372 = sbr.rel (%p370) target = $region60
        $region59: #{tpu_custom_call.1} parent=51 // pred_region
          %373 = dma.done %s366, 128
        $region60: #{tpu_custom_call.1} parent=51 // pred_fallthru
          _
        %p374 = pneg %p57
        %p375 = pneg %p54
        %p376 = scmp.lt.s32.totalorder %s29, 1
        %s377 = scalar_select %p376, %s29, 1
        %s378 = smul.addr %s377, 4
        %s379 = smul.addr %s378, 8
        %s380 = scalar_lea.vmem %s1, %s379
        %p381 = pneg %p83
        %p382 = pneg %p80
        %p383 = scmp.lt.s32.totalorder %s29, 1
        %s384 = scalar_select %p383, %s29, 1
        %s385 = smul.addr %s384, 4
        %s386 = smul.addr %s385, 8
        %s387 = scalar_lea.vmem %s2, %s386
        %p388 = pneg %p109
        %p389 = pneg %p106
        %p390 = scmp.lt.s32.totalorder %s29, 1
        %s391 = scalar_select %p390, %s29, 1
        %s392 = smul.addr %s391, 4
        %s393 = smul.addr %s392, 8
        %s394 = scalar_lea.vmem %s3, %s393
        %p395 = pneg %p135
        %p396 = pneg %p132
        %p397 = scmp.lt.s32.totalorder %s29, 1
        %s398 = scalar_select %p397, %s29, 1
        %s399 = scalar_lea.vmem %s4, %s398
        %p400 = pneg %p161
        %p401 = pneg %p158
        %p402 = scmp.lt.s32.totalorder %s29, 1
        %s403 = scalar_select %p402, %s29, 1
        %s404 = smul.addr %s403, 8
        %s405 = smul.addr %s404, 8
        %s406 = scalar_lea.vmem %s5, %s405
        %p407 = pneg %p187
        %p408 = pneg %p184
        %s409 = sand.u32 %s200, 1
        %s410 = scalar_lea.sflag [#allocation8], %s409
        %s411 = sand.u32 %s200, 1
        %s412 = smul.addr %s411, 8
        %s413 = scalar_lea.vmem [#allocation7], %s412
        %p414 = pneg %p213
        %p415 = pneg %p210
        %p416 = pneg %p234
        %p417 = pneg %p231
        %p418 = pneg %p260
        %p419 = pneg %p257
        %s420 = smul.u32 2, %s28
        %p421 = scmp.lt.s32.totalorder %s29, 1
        %s422 = scalar_select %p421, %s29, 1
        %s423 = smul.addr %s422, 4
        %s424 = smul.addr %s423, 8
        %s425 = scalar_lea.vmem %s1, %s424
        %p426 = scmp.lt.s32.totalorder %s29, 1
        %s427 = scalar_select %p426, %s29, 1
        %s428 = smul.addr %s427, 4
        %s429 = smul.addr %s428, 8
        %s430 = scalar_lea.vmem %s2, %s429
        %p431 = scmp.lt.s32.totalorder %s29, 1
        %s432 = scalar_select %p431, %s29, 1
        %s433 = smul.addr %s432, 4
        %s434 = smul.addr %s433, 8
        %s435 = scalar_lea.vmem %s3, %s434
        %p436 = scmp.lt.s32.totalorder %s29, 1
        %s437 = scalar_select %p436, %s29, 1
        %s438 = scalar_lea.vmem %s4, %s437
        %p439 = scmp.lt.s32.totalorder %s29, 1
        %s440 = scalar_select %p439, %s29, 1
        %s441 = smul.addr %s440, 8
        %s442 = smul.addr %s441, 8
        %s443 = scalar_lea.vmem %s5, %s442
        %s444 = smul.u32 2, %s28
        %p445 = scmp.eq.s32.totalorder %s29, 0
        // Predicated region
        $region61: #{tpu_custom_call.1} parent=51 // pred_check
          %p446 = pneg %p445
        $region62: #{tpu_custom_call.1} parent=51 // pred_check_branch
          %448 = sbr.rel (%p446) target = $region64
        $region63: #{tpu_custom_call.1} parent=51 // pred_region
          %v449 = vld [vmem:[#allocation4] sm:$0xff]
          %v450 = vld [vmem:[#allocation4 + $0x8] sm:$0xff]
          %vm451 = vcmask 261120
          %452 = vst.msk [vmem:[#allocation2] sm:$0xff] %vm451, %v449
          %453 = vst.msk [vmem:[#allocation2 + $0x8] sm:$0xff] %vm451, %v450
        $region64: #{tpu_custom_call.1} parent=51 // pred_fallthru
          _
        %v454 = vld [vmem:[#allocation2] sm:$0xff]
        %v455 = vld [vmem:[#allocation2 + $0x8] sm:$0xff]
        %v456 = vld [vmem:[%s369] sm:$0x1]
        %v457 = vld [vmem:[%s369 + $0x1] sm:$0x1]
        %v458 = vld [vmem:[%s369 + $0x2] sm:$0x1]
        %v459 = vld [vmem:[%s369 + $0x3] sm:$0x1]
        %v460 = vld [vmem:[%s369 + $0x4] sm:$0x1]
        %v461 = vld [vmem:[%s369 + $0x5] sm:$0x1]
        %v462 = vld [vmem:[%s369 + $0x6] sm:$0x1]
        %v463 = vld [vmem:[%s425] sm:$0xff]
        %v464 = vld [vmem:[%s425 + $0x8] sm:$0xff]
        %v465 = vld [vmem:[%s425 + $0x10] sm:$0xff]
        %v466 = vld [vmem:[%s425 + $0x18] sm:$0xff]
        %vm467 = vcmask 261120
        %v469 = vsel %vm467, %v454, 0
        %v472 = vsel %vm467, %v455, 0
        %474 = vmatprep.subr.mxu0 0.0
        %475 = vmatpush1.msra.mxu0 0.0
        %476 = vmatprep.subr.mxu0 0.0
        %477 = vmatpush1.msra.mxu0 0.0
        %478 = vmatprep.subr.mxu0 0.0
        %479 = vmatpush1.msra.mxu0 0.0
        %480 = vmatprep.subr.mxu0 0.0
        %481 = vmatpush1.msra.mxu0 0.0
        %482 = vmatprep.subr.mxu0 0.0
        %483 = vmatpush1.msra.mxu0 0.0
        %484 = vmatprep.subr.mxu0 0.0
        %485 = vmatpush1.msra.mxu0 0.0
        %486 = vmatprep.subr.mxu0 0.0
        %487 = vmatpush1.msra.mxu0 0.0
        %488 = vmatprep.subr.mxu0 0.0
        %489 = vmatpush1.msra.mxu0 0.0
        %490 = vmatprep.subr.mxu0 0.0
        %491 = vmatpush1.msra.mxu0 0.0
        %492 = vmatprep.subr.mxu0 0.0
        %493 = vmatpush1.msra.mxu0 0.0
        %494 = vmatprep.subr.mxu0 0.0
        %495 = vmatpush1.msra.mxu0 0.0
        %496 = vmatprep.subr.mxu0 0.0
        %497 = vmatpush1.msra.mxu0 0.0
        %498 = vmatprep.subr.mxu0 0.0
        %499 = vmatpush1.msra.mxu0 %v466
        %500 = vmatprep.subr.mxu0 0.0
        %501 = vmatpush1.msra.mxu0 %v465
        %502 = vmatprep.subr.mxu0 0.0
        %503 = vmatpush1.msra.mxu0 %v464
        %504 = vmatprep.subr.mxu0 0.0
        %505 = vmatpush1.msra.mxu0 %v463
        %506 = vmatprep.subr.mxu0 0.0
        %507 = vmatpush2.msra.mxu0 0.0
        %508 = vmatprep.subr.mxu0 0.0
        %509 = vmatpush2.msra.mxu0 0.0
        %510 = vmatprep.subr.mxu0 0.0
        %511 = vmatpush2.msra.mxu0 0.0
        %512 = vmatprep.subr.mxu0 0.0
        %513 = vmatpush2.msra.mxu0 0.0
        %514 = vmatprep.subr.mxu0 0.0
        %515 = vmatpush2.msra.mxu0 0.0
        %516 = vmatprep.subr.mxu0 0.0
        %517 = vmatpush2.msra.mxu0 0.0
        %518 = vmatprep.subr.mxu0 0.0
        %519 = vmatpush2.msra.mxu0 0.0
        %520 = vmatprep.subr.mxu0 0.0
        %521 = vmatpush2.msra.mxu0 0.0
        %522 = vmatprep.subr.mxu0 0.0
        %523 = vmatpush2.msra.mxu0 0.0
        %524 = vmatprep.subr.mxu0 0.0
        %525 = vmatpush2.msra.mxu0 0.0
        %526 = vmatprep.subr.mxu0 0.0
        %527 = vmatpush2.msra.mxu0 0.0
        %528 = vmatprep.subr.mxu0 0.0
        %529 = vmatpush2.msra.mxu0 0.0
        %530 = vmatprep.subr.mxu0 0.0
        %531 = vmatpush2.msra.mxu0 0.0
        %532 = vmatprep.subr.mxu0 0.0
        %533 = vmatpush2.msra.mxu0 0.0
        %534 = vmatprep.subr.mxu0 0.0
        %535 = vmatpush2.msra.mxu0 0.0
        %536 = vmatprep.subr.mxu0 0.0
        %537 = vmatpush2.msra.mxu0 0.0
        %538 = vmatprep.mubr.f32.mxu0 0.0
        %539 = vmatmul.mubr.f32.gmra.mxu0 %v469
        %v540 = vpop.f32.mrf.mxu0
        %v541 = vadd.f32 0.0, %v540
        %v542 = vpop.f32.mrf.mxu0
        %543 = vmatprep.mubr.f32.mxu0 0.0
        %544 = vmatmul.mubr.f32.gmra.mxu0 %v472
        %v545 = vpop.f32.mrf.mxu0
        %v546 = vadd.f32 0.0, %v545
        %v547 = vpop.f32.mrf.mxu0
        %548 = vdwg.mxu0
        %v549 = vlaneseq
        %v550 = vshrl.u32 %v549, 7
        %v551 = vsub.s32 0, %v550
        %v552 = vrot.slane %v456, %v551
        %v553 = vadd.f32 %v541, %v552
        %v554 = vadd.f32 %v546, %v552
        %v555 = vlaneseq
        %v556 = vshrl.u32 %v555, 7
        %v557 = vsub.s32 0, %v556
        %v558 = vrot.slane %v457, %v557
        %560 = vrot.lane.b32.xlu0 %v558, 32
        %v561 = vpop.permute.xlu0 %560
        %v563 = vadd.f32 %v541, %v561
        %v564 = vadd.f32 %v546, %v561
        %v565 = vlaneseq
        %v566 = vshrl.u32 %v565, 7
        %v567 = vsub.s32 0, %v566
        %v568 = vrot.slane %v458, %v567
        %570 = vrot.lane.b32.xlu0 %v568, 64
        %v571 = vpop.permute.xlu0 %570
        %v573 = vadd.f32 %v541, %v571
        %v574 = vadd.f32 %v546, %v571
        %576 = vrot.lane.b32.xlu0 %v563, 96
        %v577 = vpop.permute.xlu0 %576
        %vm578 = vcmask 130048
        %v580 = vsel %vm578, %v553, 0
        %v582 = vsel %vm578, %v577, 0
        %584 = vmatprep.subr.mxu0 0.0
        %585 = vmatpush1.xpose.msra.mxu0 0.0
        %586 = vmatprep.subr.mxu0 0.0
        %587 = vmatpush1.xpose.msra.mxu0 0.0
        %588 = vmatprep.subr.mxu0 0.0
        %589 = vmatpush1.xpose.msra.mxu0 0.0
        %590 = vmatprep.subr.mxu0 0.0
        %591 = vmatpush1.xpose.msra.mxu0 0.0
        %592 = vmatprep.subr.mxu0 0.0
        %593 = vmatpush1.xpose.msra.mxu0 0.0
        %594 = vmatprep.subr.mxu0 0.0
        %595 = vmatpush1.xpose.msra.mxu0 0.0
        %596 = vmatprep.subr.mxu0 0.0
        %597 = vmatpush1.xpose.msra.mxu0 0.0
        %598 = vmatprep.subr.mxu0 0.0
        %599 = vmatpush1.xpose.msra.mxu0 0.0
        %600 = vmatprep.subr.mxu0 0.0
        %601 = vmatpush1.xpose.msra.mxu0 0.0
        %602 = vmatprep.subr.mxu0 0.0
        %603 = vmatpush1.xpose.msra.mxu0 0.0
        %604 = vmatprep.subr.mxu0 0.0
        %605 = vmatpush1.xpose.msra.mxu0 0.0
        %606 = vmatprep.subr.mxu0 0.0
        %607 = vmatpush1.xpose.msra.mxu0 0.0
        %608 = vmatprep.subr.mxu0 0.0
        %609 = vmatpush1.xpose.msra.mxu0 0.0
        %610 = vmatprep.subr.mxu0 0.0
        %611 = vmatpush1.xpose.msra.mxu0 0.0
        %612 = vmatprep.subr.mxu0 0.0
        %613 = vmatpush1.xpose.msra.mxu0 0.0
        %614 = vmatprep.subr.mxu0 0.0
        %615 = vmatpush1.xpose.msra.mxu0 %v582
        %616 = vmatprep.subr.mxu0 0.0
        %617 = vmatpush2.xpose.msra.mxu0 0.0
        %618 = vmatprep.subr.mxu0 0.0
        %619 = vmatpush2.xpose.msra.mxu0 0.0
        %620 = vmatprep.subr.mxu0 0.0
        %621 = vmatpush2.xpose.msra.mxu0 0.0
        %622 = vmatprep.subr.mxu0 0.0
        %623 = vmatpush2.xpose.msra.mxu0 0.0
        %624 = vmatprep.subr.mxu0 0.0
        %625 = vmatpush2.xpose.msra.mxu0 0.0
        %626 = vmatprep.subr.mxu0 0.0
        %627 = vmatpush2.xpose.msra.mxu0 0.0
        %628 = vmatprep.subr.mxu0 0.0
        %629 = vmatpush2.xpose.msra.mxu0 0.0
        %630 = vmatprep.subr.mxu0 0.0
        %631 = vmatpush2.xpose.msra.mxu0 0.0
        %632 = vmatprep.subr.mxu0 0.0
        %633 = vmatpush2.xpose.msra.mxu0 0.0
        %634 = vmatprep.subr.mxu0 0.0
        %635 = vmatpush2.xpose.msra.mxu0 0.0
        %636 = vmatprep.subr.mxu0 0.0
        %637 = vmatpush2.xpose.msra.mxu0 0.0
        %638 = vmatprep.subr.mxu0 0.0
        %639 = vmatpush2.xpose.msra.mxu0 0.0
        %640 = vmatprep.subr.mxu0 0.0
        %641 = vmatpush2.xpose.msra.mxu0 0.0
        %642 = vmatprep.subr.mxu0 0.0
        %643 = vmatpush2.xpose.msra.mxu0 0.0
        %644 = vmatprep.subr.mxu0 0.0
        %645 = vmatpush2.xpose.msra.mxu0 0.0
        %646 = vmatprep.subr.mxu0 0.0
        %647 = vmatpush2.xpose.msra.mxu0 0.0
        %648 = vmatprep.mubr.f32.mxu0 0.0
        %649 = vmatmul.mubr.f32.gmra.mxu0 %v580
        %v650 = vpop.f32.mrf.mxu0
        %v651 = vadd.f32 0.0, %v650
        %v652 = vpop.f32.mrf.mxu0
        %653 = vdwg.mxu0
        %vm654 = vcmask 64512
        %v655 = vsel %vm654, %v651, -inf
        %656 = vmax.xlane.f32.xlu0 %v655
        %v657 = vpop.xlane.xlu0 %656
        %v658 = vsub.f32 %v651, %v657
        %v659 = vmul.f32 %v658, 1.442695
        %v660 = vpow.pop %v659
        %v661 = vsel %vm654, %v660, 0.0
        %662 = vadd.xlane.f32.xlu0 %v661
        %v663 = vpop.xlane.xlu0 %662
        %v664 = vrcp.pop %v663
        %v665 = vmul.f32 %v660, %v664
        %667 = vrot.lane.b32.xlu0 %v573, 64
        %v668 = vpop.permute.xlu0 %667
        %v671 = vsel %vm654, %v665, 0
        %673 = vmatprep.subr.mxu0 0.0
        %674 = vmatpush1.msra.mxu0 0.0
        %675 = vmatprep.subr.mxu0 0.0
        %676 = vmatpush1.msra.mxu0 0.0
        %677 = vmatprep.subr.mxu0 0.0
        %678 = vmatpush1.msra.mxu0 0.0
        %679 = vmatprep.subr.mxu0 0.0
        %680 = vmatpush1.msra.mxu0 0.0
        %681 = vmatprep.subr.mxu0 0.0
        %682 = vmatpush1.msra.mxu0 0.0
        %683 = vmatprep.subr.mxu0 0.0
        %684 = vmatpush1.msra.mxu0 0.0
        %685 = vmatprep.subr.mxu0 0.0
        %686 = vmatpush1.msra.mxu0 0.0
        %687 = vmatprep.subr.mxu0 0.0
        %688 = vmatpush1.msra.mxu0 0.0
        %689 = vmatprep.subr.mxu0 0.0
        %690 = vmatpush1.msra.mxu0 0.0
        %691 = vmatprep.subr.mxu0 0.0
        %692 = vmatpush1.msra.mxu0 0.0
        %693 = vmatprep.subr.mxu0 0.0
        %694 = vmatpush1.msra.mxu0 0.0
        %695 = vmatprep.subr.mxu0 0.0
        %696 = vmatpush1.msra.mxu0 0.0
        %697 = vmatprep.subr.mxu0 0.0
        %698 = vmatpush1.msra.mxu0 0.0
        %699 = vmatprep.subr.mxu0 0.0
        %700 = vmatpush1.msra.mxu0 0.0
        %701 = vmatprep.subr.mxu0 0.0
        %702 = vmatpush1.msra.mxu0 0.0
        %703 = vmatprep.subr.mxu0 0.0
        %704 = vmatpush1.msra.mxu0 %v668
        %705 = vmatprep.subr.mxu0 0.0
        %706 = vmatpush2.msra.mxu0 0.0
        %707 = vmatprep.subr.mxu0 0.0
        %708 = vmatpush2.msra.mxu0 0.0
        %709 = vmatprep.subr.mxu0 0.0
        %710 = vmatpush2.msra.mxu0 0.0
        %711 = vmatprep.subr.mxu0 0.0
        %712 = vmatpush2.msra.mxu0 0.0
        %713 = vmatprep.subr.mxu0 0.0
        %714 = vmatpush2.msra.mxu0 0.0
        %715 = vmatprep.subr.mxu0 0.0
        %716 = vmatpush2.msra.mxu0 0.0
        %717 = vmatprep.subr.mxu0 0.0
        %718 = vmatpush2.msra.mxu0 0.0
        %719 = vmatprep.subr.mxu0 0.0
        %720 = vmatpush2.msra.mxu0 0.0
        %721 = vmatprep.subr.mxu0 0.0
        %722 = vmatpush2.msra.mxu0 0.0
        %723 = vmatprep.subr.mxu0 0.0
        %724 = vmatpush2.msra.mxu0 0.0
        %725 = vmatprep.subr.mxu0 0.0
        %726 = vmatpush2.msra.mxu0 0.0
        %727 = vmatprep.subr.mxu0 0.0
        %728 = vmatpush2.msra.mxu0 0.0
        %729 = vmatprep.subr.mxu0 0.0
        %730 = vmatpush2.msra.mxu0 0.0
        %731 = vmatprep.subr.mxu0 0.0
        %732 = vmatpush2.msra.mxu0 0.0
        %733 = vmatprep.subr.mxu0 0.0
        %734 = vmatpush2.msra.mxu0 0.0
        %735 = vmatprep.subr.mxu0 0.0
        %736 = vmatpush2.msra.mxu0 0.0
        %737 = vmatprep.mubr.f32.mxu0 0.0
        %738 = vmatmul.mubr.f32.gmra.mxu0 %v671
        %v739 = vpop.f32.mrf.mxu0
        %v740 = vadd.f32 0.0, %v739
        %v741 = vpop.f32.mrf.mxu0
        %742 = vdwg.mxu0
        %743 = vst.msk [vmem:[#allocation3] sm:$0xff] %vm578, %v740
        %744 = vrot.lane.b32.xlu0 %v553, 112
        %v745 = vpop.permute.xlu0 %744
        %746 = vrot.lane.b32.xlu0 %v563, 80
        %v747 = vpop.permute.xlu0 %746
        %v748 = vsel %vm578, %v745, 0
        %v750 = vsel %vm578, %v747, 0
        %752 = vmatprep.subr.mxu0 0.0
        %753 = vmatpush1.xpose.msra.mxu0 0.0
        %754 = vmatprep.subr.mxu0 0.0
        %755 = vmatpush1.xpose.msra.mxu0 0.0
        %756 = vmatprep.subr.mxu0 0.0
        %757 = vmatpush1.xpose.msra.mxu0 0.0
        %758 = vmatprep.subr.mxu0 0.0
        %759 = vmatpush1.xpose.msra.mxu0 0.0
        %760 = vmatprep.subr.mxu0 0.0
        %761 = vmatpush1.xpose.msra.mxu0 0.0
        %762 = vmatprep.subr.mxu0 0.0
        %763 = vmatpush1.xpose.msra.mxu0 0.0
        %764 = vmatprep.subr.mxu0 0.0
        %765 = vmatpush1.xpose.msra.mxu0 0.0
        %766 = vmatprep.subr.mxu0 0.0
        %767 = vmatpush1.xpose.msra.mxu0 0.0
        %768 = vmatprep.subr.mxu0 0.0
        %769 = vmatpush1.xpose.msra.mxu0 0.0
        %770 = vmatprep.subr.mxu0 0.0
        %771 = vmatpush1.xpose.msra.mxu0 0.0
        %772 = vmatprep.subr.mxu0 0.0
        %773 = vmatpush1.xpose.msra.mxu0 0.0
        %774 = vmatprep.subr.mxu0 0.0
        %775 = vmatpush1.xpose.msra.mxu0 0.0
        %776 = vmatprep.subr.mxu0 0.0
        %777 = vmatpush1.xpose.msra.mxu0 0.0
        %778 = vmatprep.subr.mxu0 0.0
        %779 = vmatpush1.xpose.msra.mxu0 0.0
        %780 = vmatprep.subr.mxu0 0.0
        %781 = vmatpush1.xpose.msra.mxu0 0.0
        %782 = vmatprep.subr.mxu0 0.0
        %783 = vmatpush1.xpose.msra.mxu0 %v750
        %784 = vmatprep.subr.mxu0 0.0
        %785 = vmatpush2.xpose.msra.mxu0 0.0
        %786 = vmatprep.subr.mxu0 0.0
        %787 = vmatpush2.xpose.msra.mxu0 0.0
        %788 = vmatprep.subr.mxu0 0.0
        %789 = vmatpush2.xpose.msra.mxu0 0.0
        %790 = vmatprep.subr.mxu0 0.0
        %791 = vmatpush2.xpose.msra.mxu0 0.0
        %792 = vmatprep.subr.mxu0 0.0
        %793 = vmatpush2.xpose.msra.mxu0 0.0
        %794 = vmatprep.subr.mxu0 0.0
        %795 = vmatpush2.xpose.msra.mxu0 0.0
        %796 = vmatprep.subr.mxu0 0.0
        %797 = vmatpush2.xpose.msra.mxu0 0.0
        %798 = vmatprep.subr.mxu0 0.0
        %799 = vmatpush2.xpose.msra.mxu0 0.0
        %800 = vmatprep.subr.mxu0 0.0
        %801 = vmatpush2.xpose.msra.mxu0 0.0
        %802 = vmatprep.subr.mxu0 0.0
        %803 = vmatpush2.xpose.msra.mxu0 0.0
        %804 = vmatprep.subr.mxu0 0.0
        %805 = vmatpush2.xpose.msra.mxu0 0.0
        %806 = vmatprep.subr.mxu0 0.0
        %807 = vmatpush2.xpose.msra.mxu0 0.0
        %808 = vmatprep.subr.mxu0 0.0
        %809 = vmatpush2.xpose.msra.mxu0 0.0
        %810 = vmatprep.subr.mxu0 0.0
        %811 = vmatpush2.xpose.msra.mxu0 0.0
        %812 = vmatprep.subr.mxu0 0.0
        %813 = vmatpush2.xpose.msra.mxu0 0.0
        %814 = vmatprep.subr.mxu0 0.0
        %815 = vmatpush2.xpose.msra.mxu0 0.0
        %816 = vmatprep.mubr.f32.mxu0 0.0
        %817 = vmatmul.mubr.f32.gmra.mxu0 %v748
        %v818 = vpop.f32.mrf.mxu0
        %v819 = vadd.f32 0.0, %v818
        %v820 = vpop.f32.mrf.mxu0
        %821 = vdwg.mxu0
        %v822 = vsel %vm654, %v819, -inf
        %823 = vmax.xlane.f32.xlu0 %v822
        %v824 = vpop.xlane.xlu0 %823
        %v825 = vsub.f32 %v819, %v824
        %v826 = vmul.f32 %v825, 1.442695
        %v827 = vpow.pop %v826
        %v828 = vsel %vm654, %v827, 0.0
        %829 = vadd.xlane.f32.xlu0 %v828
        %v830 = vpop.xlane.xlu0 %829
        %v831 = vrcp.pop %v830
        %v832 = vmul.f32 %v827, %v831
        %833 = vrot.lane.b32.xlu0 %v573, 48
        %v834 = vpop.permute.xlu0 %833
        %v837 = vsel %vm654, %v832, 0
        %839 = vmatprep.subr.mxu0 0.0
        %840 = vmatpush1.msra.mxu0 0.0
        %841 = vmatprep.subr.mxu0 0.0
        %842 = vmatpush1.msra.mxu0 0.0
        %843 = vmatprep.subr.mxu0 0.0
        %844 = vmatpush1.msra.mxu0 0.0
        %845 = vmatprep.subr.mxu0 0.0
        %846 = vmatpush1.msra.mxu0 0.0
        %847 = vmatprep.subr.mxu0 0.0
        %848 = vmatpush1.msra.mxu0 0.0
        %849 = vmatprep.subr.mxu0 0.0
        %850 = vmatpush1.msra.mxu0 0.0
        %851 = vmatprep.subr.mxu0 0.0
        %852 = vmatpush1.msra.mxu0 0.0
        %853 = vmatprep.subr.mxu0 0.0
        %854 = vmatpush1.msra.mxu0 0.0
        %855 = vmatprep.subr.mxu0 0.0
        %856 = vmatpush1.msra.mxu0 0.0
        %857 = vmatprep.subr.mxu0 0.0
        %858 = vmatpush1.msra.mxu0 0.0
        %859 = vmatprep.subr.mxu0 0.0
        %860 = vmatpush1.msra.mxu0 0.0
        %861 = vmatprep.subr.mxu0 0.0
        %862 = vmatpush1.msra.mxu0 0.0
        %863 = vmatprep.subr.mxu0 0.0
        %864 = vmatpush1.msra.mxu0 0.0
        %865 = vmatprep.subr.mxu0 0.0
        %866 = vmatpush1.msra.mxu0 0.0
        %867 = vmatprep.subr.mxu0 0.0
        %868 = vmatpush1.msra.mxu0 0.0
        %869 = vmatprep.subr.mxu0 0.0
        %870 = vmatpush1.msra.mxu0 %v834
        %871 = vmatprep.subr.mxu0 0.0
        %872 = vmatpush2.msra.mxu0 0.0
        %873 = vmatprep.subr.mxu0 0.0
        %874 = vmatpush2.msra.mxu0 0.0
        %875 = vmatprep.subr.mxu0 0.0
        %876 = vmatpush2.msra.mxu0 0.0
        %877 = vmatprep.subr.mxu0 0.0
        %878 = vmatpush2.msra.mxu0 0.0
        %879 = vmatprep.subr.mxu0 0.0
        %880 = vmatpush2.msra.mxu0 0.0
        %881 = vmatprep.subr.mxu0 0.0
        %882 = vmatpush2.msra.mxu0 0.0
        %883 = vmatprep.subr.mxu0 0.0
        %884 = vmatpush2.msra.mxu0 0.0
        %885 = vmatprep.subr.mxu0 0.0
        %886 = vmatpush2.msra.mxu0 0.0
        %887 = vmatprep.subr.mxu0 0.0
        %888 = vmatpush2.msra.mxu0 0.0
        %889 = vmatprep.subr.mxu0 0.0
        %890 = vmatpush2.msra.mxu0 0.0
        %891 = vmatprep.subr.mxu0 0.0
        %892 = vmatpush2.msra.mxu0 0.0
        %893 = vmatprep.subr.mxu0 0.0
        %894 = vmatpush2.msra.mxu0 0.0
        %895 = vmatprep.subr.mxu0 0.0
        %896 = vmatpush2.msra.mxu0 0.0
        %897 = vmatprep.subr.mxu0 0.0
        %898 = vmatpush2.msra.mxu0 0.0
        %899 = vmatprep.subr.mxu0 0.0
        %900 = vmatpush2.msra.mxu0 0.0
        %901 = vmatprep.subr.mxu0 0.0
        %902 = vmatpush2.msra.mxu0 0.0
        %903 = vmatprep.mubr.f32.mxu0 0.0
        %904 = vmatmul.mubr.f32.gmra.mxu0 %v837
        %v905 = vpop.f32.mrf.mxu0
        %v906 = vadd.f32 0.0, %v905
        %v907 = vpop.f32.mrf.mxu0
        %908 = vdwg.mxu0
        %910 = vrot.lane.b32.xlu0 %v906, 16
        %v911 = vpop.permute.xlu0 %910
        %vm913 = vcmask 261248
        %914 = vst.msk [vmem:[#allocation3] sm:$0xff] %vm913, %v911
        %916 = vrot.lane.b32.xlu0 %v564, 96
        %v917 = vpop.permute.xlu0 %916
        %v919 = vsel %vm578, %v554, 0
        %v921 = vsel %vm578, %v917, 0
        %923 = vmatprep.subr.mxu0 0.0
        %924 = vmatpush1.xpose.msra.mxu0 0.0
        %925 = vmatprep.subr.mxu0 0.0
        %926 = vmatpush1.xpose.msra.mxu0 0.0
        %927 = vmatprep.subr.mxu0 0.0
        %928 = vmatpush1.xpose.msra.mxu0 0.0
        %929 = vmatprep.subr.mxu0 0.0
        %930 = vmatpush1.xpose.msra.mxu0 0.0
        %931 = vmatprep.subr.mxu0 0.0
        %932 = vmatpush1.xpose.msra.mxu0 0.0
        %933 = vmatprep.subr.mxu0 0.0
        %934 = vmatpush1.xpose.msra.mxu0 0.0
        %935 = vmatprep.subr.mxu0 0.0
        %936 = vmatpush1.xpose.msra.mxu0 0.0
        %937 = vmatprep.subr.mxu0 0.0
        %938 = vmatpush1.xpose.msra.mxu0 0.0
        %939 = vmatprep.subr.mxu0 0.0
        %940 = vmatpush1.xpose.msra.mxu0 0.0
        %941 = vmatprep.subr.mxu0 0.0
        %942 = vmatpush1.xpose.msra.mxu0 0.0
        %943 = vmatprep.subr.mxu0 0.0
        %944 = vmatpush1.xpose.msra.mxu0 0.0
        %945 = vmatprep.subr.mxu0 0.0
        %946 = vmatpush1.xpose.msra.mxu0 0.0
        %947 = vmatprep.subr.mxu0 0.0
        %948 = vmatpush1.xpose.msra.mxu0 0.0
        %949 = vmatprep.subr.mxu0 0.0
        %950 = vmatpush1.xpose.msra.mxu0 0.0
        %951 = vmatprep.subr.mxu0 0.0
        %952 = vmatpush1.xpose.msra.mxu0 0.0
        %953 = vmatprep.subr.mxu0 0.0
        %954 = vmatpush1.xpose.msra.mxu0 %v921
        %955 = vmatprep.subr.mxu0 0.0
        %956 = vmatpush2.xpose.msra.mxu0 0.0
        %957 = vmatprep.subr.mxu0 0.0
        %958 = vmatpush2.xpose.msra.mxu0 0.0
        %959 = vmatprep.subr.mxu0 0.0
        %960 = vmatpush2.xpose.msra.mxu0 0.0
        %961 = vmatprep.subr.mxu0 0.0
        %962 = vmatpush2.xpose.msra.mxu0 0.0
        %963 = vmatprep.subr.mxu0 0.0
        %964 = vmatpush2.xpose.msra.mxu0 0.0
        %965 = vmatprep.subr.mxu0 0.0
        %966 = vmatpush2.xpose.msra.mxu0 0.0
        %967 = vmatprep.subr.mxu0 0.0
        %968 = vmatpush2.xpose.msra.mxu0 0.0
        %969 = vmatprep.subr.mxu0 0.0
        %970 = vmatpush2.xpose.msra.mxu0 0.0
        %971 = vmatprep.subr.mxu0 0.0
        %972 = vmatpush2.xpose.msra.mxu0 0.0
        %973 = vmatprep.subr.mxu0 0.0
        %974 = vmatpush2.xpose.msra.mxu0 0.0
        %975 = vmatprep.subr.mxu0 0.0
        %976 = vmatpush2.xpose.msra.mxu0 0.0
        %977 = vmatprep.subr.mxu0 0.0
        %978 = vmatpush2.xpose.msra.mxu0 0.0
        %979 = vmatprep.subr.mxu0 0.0
        %980 = vmatpush2.xpose.msra.mxu0 0.0
        %981 = vmatprep.subr.mxu0 0.0
        %982 = vmatpush2.xpose.msra.mxu0 0.0
        %983 = vmatprep.subr.mxu0 0.0
        %984 = vmatpush2.xpose.msra.mxu0 0.0
        %985 = vmatprep.subr.mxu0 0.0
        %986 = vmatpush2.xpose.msra.mxu0 0.0
        %987 = vmatprep.mubr.f32.mxu0 0.0
        %988 = vmatmul.mubr.f32.gmra.mxu0 %v919
        %v989 = vpop.f32.mrf.mxu0
        %v990 = vadd.f32 0.0, %v989
        %v991 = vpop.f32.mrf.mxu0
        %992 = vdwg.mxu0
        %v993 = vsel %vm654, %v990, -inf
        %994 = vmax.xlane.f32.xlu0 %v993
        %v995 = vpop.xlane.xlu0 %994
        %v996 = vsub.f32 %v990, %v995
        %v997 = vmul.f32 %v996, 1.442695
        %v998 = vpow.pop %v997
        %v999 = vsel %vm654, %v998, 0.0
        %1000 = vadd.xlane.f32.xlu0 %v999
        %v1001 = vpop.xlane.xlu0 %1000
        %v1002 = vrcp.pop %v1001
        %v1003 = vmul.f32 %v998, %v1002
        %1005 = vrot.lane.b32.xlu0 %v574, 64
        %v1006 = vpop.permute.xlu0 %1005
        %v1009 = vsel %vm654, %v1003, 0
        %1011 = vmatprep.subr.mxu0 0.0
        %1012 = vmatpush1.msra.mxu0 0.0
        %1013 = vmatprep.subr.mxu0 0.0
        %1014 = vmatpush1.msra.mxu0 0.0
        %1015 = vmatprep.subr.mxu0 0.0
        %1016 = vmatpush1.msra.mxu0 0.0
        %1017 = vmatprep.subr.mxu0 0.0
        %1018 = vmatpush1.msra.mxu0 0.0
        %1019 = vmatprep.subr.mxu0 0.0
        %1020 = vmatpush1.msra.mxu0 0.0
        %1021 = vmatprep.subr.mxu0 0.0
        %1022 = vmatpush1.msra.mxu0 0.0
        %1023 = vmatprep.subr.mxu0 0.0
        %1024 = vmatpush1.msra.mxu0 0.0
        %1025 = vmatprep.subr.mxu0 0.0
        %1026 = vmatpush1.msra.mxu0 0.0
        %1027 = vmatprep.subr.mxu0 0.0
        %1028 = vmatpush1.msra.mxu0 0.0
        %1029 = vmatprep.subr.mxu0 0.0
        %1030 = vmatpush1.msra.mxu0 0.0
        %1031 = vmatprep.subr.mxu0 0.0
        %1032 = vmatpush1.msra.mxu0 0.0
        %1033 = vmatprep.subr.mxu0 0.0
        %1034 = vmatpush1.msra.mxu0 0.0
        %1035 = vmatprep.subr.mxu0 0.0
        %1036 = vmatpush1.msra.mxu0 0.0
        %1037 = vmatprep.subr.mxu0 0.0
        %1038 = vmatpush1.msra.mxu0 0.0
        %1039 = vmatprep.subr.mxu0 0.0
        %1040 = vmatpush1.msra.mxu0 0.0
        %1041 = vmatprep.subr.mxu0 0.0
        %1042 = vmatpush1.msra.mxu0 %v1006
        %1043 = vmatprep.subr.mxu0 0.0
        %1044 = vmatpush2.msra.mxu0 0.0
        %1045 = vmatprep.subr.mxu0 0.0
        %1046 = vmatpush2.msra.mxu0 0.0
        %1047 = vmatprep.subr.mxu0 0.0
        %1048 = vmatpush2.msra.mxu0 0.0
        %1049 = vmatprep.subr.mxu0 0.0
        %1050 = vmatpush2.msra.mxu0 0.0
        %1051 = vmatprep.subr.mxu0 0.0
        %1052 = vmatpush2.msra.mxu0 0.0
        %1053 = vmatprep.subr.mxu0 0.0
        %1054 = vmatpush2.msra.mxu0 0.0
        %1055 = vmatprep.subr.mxu0 0.0
        %1056 = vmatpush2.msra.mxu0 0.0
        %1057 = vmatprep.subr.mxu0 0.0
        %1058 = vmatpush2.msra.mxu0 0.0
        %1059 = vmatprep.subr.mxu0 0.0
        %1060 = vmatpush2.msra.mxu0 0.0
        %1061 = vmatprep.subr.mxu0 0.0
        %1062 = vmatpush2.msra.mxu0 0.0
        %1063 = vmatprep.subr.mxu0 0.0
        %1064 = vmatpush2.msra.mxu0 0.0
        %1065 = vmatprep.subr.mxu0 0.0
        %1066 = vmatpush2.msra.mxu0 0.0
        %1067 = vmatprep.subr.mxu0 0.0
        %1068 = vmatpush2.msra.mxu0 0.0
        %1069 = vmatprep.subr.mxu0 0.0
        %1070 = vmatpush2.msra.mxu0 0.0
        %1071 = vmatprep.subr.mxu0 0.0
        %1072 = vmatpush2.msra.mxu0 0.0
        %1073 = vmatprep.subr.mxu0 0.0
        %1074 = vmatpush2.msra.mxu0 0.0
        %1075 = vmatprep.mubr.f32.mxu0 0.0
        %1076 = vmatmul.mubr.f32.gmra.mxu0 %v1009
        %v1077 = vpop.f32.mrf.mxu0
        %v1078 = vadd.f32 0.0, %v1077
        %v1079 = vpop.f32.mrf.mxu0
        %1080 = vdwg.mxu0
        %1081 = vst.msk [vmem:[#allocation3 + $0x8] sm:$0xff] %vm578, %v1078
        %1082 = vrot.lane.b32.xlu0 %v554, 112
        %v1083 = vpop.permute.xlu0 %1082
        %1084 = vrot.lane.b32.xlu0 %v564, 80
        %v1085 = vpop.permute.xlu0 %1084
        %v1086 = vsel %vm578, %v1083, 0
        %v1088 = vsel %vm578, %v1085, 0
        %1090 = vmatprep.subr.mxu0 0.0
        %1091 = vmatpush1.xpose.msra.mxu0 0.0
        %1092 = vmatprep.subr.mxu0 0.0
        %1093 = vmatpush1.xpose.msra.mxu0 0.0
        %1094 = vmatprep.subr.mxu0 0.0
        %1095 = vmatpush1.xpose.msra.mxu0 0.0
        %1096 = vmatprep.subr.mxu0 0.0
        %1097 = vmatpush1.xpose.msra.mxu0 0.0
        %1098 = vmatprep.subr.mxu0 0.0
        %1099 = vmatpush1.xpose.msra.mxu0 0.0
        %1100 = vmatprep.subr.mxu0 0.0
        %1101 = vmatpush1.xpose.msra.mxu0 0.0
        %1102 = vmatprep.subr.mxu0 0.0
        %1103 = vmatpush1.xpose.msra.mxu0 0.0
        %1104 = vmatprep.subr.mxu0 0.0
        %1105 = vmatpush1.xpose.msra.mxu0 0.0
        %1106 = vmatprep.subr.mxu0 0.0
        %1107 = vmatpush1.xpose.msra.mxu0 0.0
        %1108 = vmatprep.subr.mxu0 0.0
        %1109 = vmatpush1.xpose.msra.mxu0 0.0
        %1110 = vmatprep.subr.mxu0 0.0
        %1111 = vmatpush1.xpose.msra.mxu0 0.0
        %1112 = vmatprep.subr.mxu0 0.0
        %1113 = vmatpush1.xpose.msra.mxu0 0.0
        %1114 = vmatprep.subr.mxu0 0.0
        %1115 = vmatpush1.xpose.msra.mxu0 0.0
        %1116 = vmatprep.subr.mxu0 0.0
        %1117 = vmatpush1.xpose.msra.mxu0 0.0
        %1118 = vmatprep.subr.mxu0 0.0
        %1119 = vmatpush1.xpose.msra.mxu0 0.0
        %1120 = vmatprep.subr.mxu0 0.0
        %1121 = vmatpush1.xpose.msra.mxu0 %v1088
        %1122 = vmatprep.subr.mxu0 0.0
        %1123 = vmatpush2.xpose.msra.mxu0 0.0
        %1124 = vmatprep.subr.mxu0 0.0
        %1125 = vmatpush2.xpose.msra.mxu0 0.0
        %1126 = vmatprep.subr.mxu0 0.0
        %1127 = vmatpush2.xpose.msra.mxu0 0.0
        %1128 = vmatprep.subr.mxu0 0.0
        %1129 = vmatpush2.xpose.msra.mxu0 0.0
        %1130 = vmatprep.subr.mxu0 0.0
        %1131 = vmatpush2.xpose.msra.mxu0 0.0
        %1132 = vmatprep.subr.mxu0 0.0
        %1133 = vmatpush2.xpose.msra.mxu0 0.0
        %1134 = vmatprep.subr.mxu0 0.0
        %1135 = vmatpush2.xpose.msra.mxu0 0.0
        %1136 = vmatprep.subr.mxu0 0.0
        %1137 = vmatpush2.xpose.msra.mxu0 0.0
        %1138 = vmatprep.subr.mxu0 0.0
        %1139 = vmatpush2.xpose.msra.mxu0 0.0
        %1140 = vmatprep.subr.mxu0 0.0
        %1141 = vmatpush2.xpose.msra.mxu0 0.0
        %1142 = vmatprep.subr.mxu0 0.0
        %1143 = vmatpush2.xpose.msra.mxu0 0.0
        %1144 = vmatprep.subr.mxu0 0.0
        %1145 = vmatpush2.xpose.msra.mxu0 0.0
        %1146 = vmatprep.subr.mxu0 0.0
        %1147 = vmatpush2.xpose.msra.mxu0 0.0
        %1148 = vmatprep.subr.mxu0 0.0
        %1149 = vmatpush2.xpose.msra.mxu0 0.0
        %1150 = vmatprep.subr.mxu0 0.0
        %1151 = vmatpush2.xpose.msra.mxu0 0.0
        %1152 = vmatprep.subr.mxu0 0.0
        %1153 = vmatpush2.xpose.msra.mxu0 0.0
        %1154 = vmatprep.mubr.f32.mxu0 0.0
        %1155 = vmatmul.mubr.f32.gmra.mxu0 %v1086
        %v1156 = vpop.f32.mrf.mxu0
        %v1157 = vadd.f32 0.0, %v1156
        %v1158 = vpop.f32.mrf.mxu0
        %1159 = vdwg.mxu0
        %v1160 = vsel %vm654, %v1157, -inf
        %1161 = vmax.xlane.f32.xlu0 %v1160
        %v1162 = vpop.xlane.xlu0 %1161
        %v1163 = vsub.f32 %v1157, %v1162
        %v1164 = vmul.f32 %v1163, 1.442695
        %v1165 = vpow.pop %v1164
        %v1166 = vsel %vm654, %v1165, 0.0
        %1167 = vadd.xlane.f32.xlu0 %v1166
        %v1168 = vpop.xlane.xlu0 %1167
        %v1169 = vrcp.pop %v1168
        %v1170 = vmul.f32 %v1165, %v1169
        %1171 = vrot.lane.b32.xlu0 %v574, 48
        %v1172 = vpop.permute.xlu0 %1171
        %v1175 = vsel %vm654, %v1170, 0
        %1177 = vmatprep.subr.mxu0 0.0
        %1178 = vmatpush1.msra.mxu0 0.0
        %1179 = vmatprep.subr.mxu0 0.0
        %1180 = vmatpush1.msra.mxu0 0.0
        %1181 = vmatprep.subr.mxu0 0.0
        %1182 = vmatpush1.msra.mxu0 0.0
        %1183 = vmatprep.subr.mxu0 0.0
        %1184 = vmatpush1.msra.mxu0 0.0
        %1185 = vmatprep.subr.mxu0 0.0
        %1186 = vmatpush1.msra.mxu0 0.0
        %1187 = vmatprep.subr.mxu0 0.0
        %1188 = vmatpush1.msra.mxu0 0.0
        %1189 = vmatprep.subr.mxu0 0.0
        %1190 = vmatpush1.msra.mxu0 0.0
        %1191 = vmatprep.subr.mxu0 0.0
        %1192 = vmatpush1.msra.mxu0 0.0
        %1193 = vmatprep.subr.mxu0 0.0
        %1194 = vmatpush1.msra.mxu0 0.0
        %1195 = vmatprep.subr.mxu0 0.0
        %1196 = vmatpush1.msra.mxu0 0.0
        %1197 = vmatprep.subr.mxu0 0.0
        %1198 = vmatpush1.msra.mxu0 0.0
        %1199 = vmatprep.subr.mxu0 0.0
        %1200 = vmatpush1.msra.mxu0 0.0
        %1201 = vmatprep.subr.mxu0 0.0
        %1202 = vmatpush1.msra.mxu0 0.0
        %1203 = vmatprep.subr.mxu0 0.0
        %1204 = vmatpush1.msra.mxu0 0.0
        %1205 = vmatprep.subr.mxu0 0.0
        %1206 = vmatpush1.msra.mxu0 0.0
        %1207 = vmatprep.subr.mxu0 0.0
        %1208 = vmatpush1.msra.mxu0 %v1172
        %1209 = vmatprep.subr.mxu0 0.0
        %1210 = vmatpush2.msra.mxu0 0.0
        %1211 = vmatprep.subr.mxu0 0.0
        %1212 = vmatpush2.msra.mxu0 0.0
        %1213 = vmatprep.subr.mxu0 0.0
        %1214 = vmatpush2.msra.mxu0 0.0
        %1215 = vmatprep.subr.mxu0 0.0
        %1216 = vmatpush2.msra.mxu0 0.0
        %1217 = vmatprep.subr.mxu0 0.0
        %1218 = vmatpush2.msra.mxu0 0.0
        %1219 = vmatprep.subr.mxu0 0.0
        %1220 = vmatpush2.msra.mxu0 0.0
        %1221 = vmatprep.subr.mxu0 0.0
        %1222 = vmatpush2.msra.mxu0 0.0
        %1223 = vmatprep.subr.mxu0 0.0
        %1224 = vmatpush2.msra.mxu0 0.0
        %1225 = vmatprep.subr.mxu0 0.0
        %1226 = vmatpush2.msra.mxu0 0.0
        %1227 = vmatprep.subr.mxu0 0.0
        %1228 = vmatpush2.msra.mxu0 0.0
        %1229 = vmatprep.subr.mxu0 0.0
        %1230 = vmatpush2.msra.mxu0 0.0
        %1231 = vmatprep.subr.mxu0 0.0
        %1232 = vmatpush2.msra.mxu0 0.0
        %1233 = vmatprep.subr.mxu0 0.0
        %1234 = vmatpush2.msra.mxu0 0.0
        %1235 = vmatprep.subr.mxu0 0.0
        %1236 = vmatpush2.msra.mxu0 0.0
        %1237 = vmatprep.subr.mxu0 0.0
        %1238 = vmatpush2.msra.mxu0 0.0
        %1239 = vmatprep.subr.mxu0 0.0
        %1240 = vmatpush2.msra.mxu0 0.0
        %1241 = vmatprep.mubr.f32.mxu0 0.0
        %1242 = vmatmul.mubr.f32.gmra.mxu0 %v1175
        %v1243 = vpop.f32.mrf.mxu0
        %v1244 = vadd.f32 0.0, %v1243
        %v1245 = vpop.f32.mrf.mxu0
        %1246 = vdwg.mxu0
        %1248 = vrot.lane.b32.xlu0 %v1244, 16
        %v1249 = vpop.permute.xlu0 %1248
        %1251 = vst.msk [vmem:[#allocation3 + $0x8] sm:$0xff] %vm913, %v1249
        %v1252 = vld [vmem:[#allocation3] sm:$0xff]
        %v1253 = vld [vmem:[#allocation3 + $0x8] sm:$0xff]
        %v1254 = vld [vmem:[%s430] sm:$0xff]
        %v1255 = vld [vmem:[%s430 + $0x8] sm:$0xff]
        %v1256 = vld [vmem:[%s430 + $0x10] sm:$0xff]
        %v1257 = vld [vmem:[%s430 + $0x18] sm:$0xff]
        %v1258 = vlaneseq
        %v1259 = vshrl.u32 %v1258, 7
        %v1260 = vsub.s32 0, %v1259
        %v1261 = vrot.slane %v459, %v1260
        %v1263 = vsel %vm467, %v1252, 0
        %v1266 = vsel %vm467, %v1253, 0
        %1268 = vmatprep.subr.mxu0 0.0
        %1269 = vmatpush1.msra.mxu0 0.0
        %1270 = vmatprep.subr.mxu0 0.0
        %1271 = vmatpush1.msra.mxu0 0.0
        %1272 = vmatprep.subr.mxu0 0.0
        %1273 = vmatpush1.msra.mxu0 0.0
        %1274 = vmatprep.subr.mxu0 0.0
        %1275 = vmatpush1.msra.mxu0 0.0
        %1276 = vmatprep.subr.mxu0 0.0
        %1277 = vmatpush1.msra.mxu0 0.0
        %1278 = vmatprep.subr.mxu0 0.0
        %1279 = vmatpush1.msra.mxu0 0.0
        %1280 = vmatprep.subr.mxu0 0.0
        %1281 = vmatpush1.msra.mxu0 0.0
        %1282 = vmatprep.subr.mxu0 0.0
        %1283 = vmatpush1.msra.mxu0 0.0
        %1284 = vmatprep.subr.mxu0 0.0
        %1285 = vmatpush1.msra.mxu0 0.0
        %1286 = vmatprep.subr.mxu0 0.0
        %1287 = vmatpush1.msra.mxu0 0.0
        %1288 = vmatprep.subr.mxu0 0.0
        %1289 = vmatpush1.msra.mxu0 0.0
        %1290 = vmatprep.subr.mxu0 0.0
        %1291 = vmatpush1.msra.mxu0 0.0
        %1292 = vmatprep.subr.mxu0 0.0
        %1293 = vmatpush1.msra.mxu0 %v1257
        %1294 = vmatprep.subr.mxu0 0.0
        %1295 = vmatpush1.msra.mxu0 %v1256
        %1296 = vmatprep.subr.mxu0 0.0
        %1297 = vmatpush1.msra.mxu0 %v1255
        %1298 = vmatprep.subr.mxu0 0.0
        %1299 = vmatpush1.msra.mxu0 %v1254
        %1300 = vmatprep.subr.mxu0 0.0
        %1301 = vmatpush2.msra.mxu0 0.0
        %1302 = vmatprep.subr.mxu0 0.0
        %1303 = vmatpush2.msra.mxu0 0.0
        %1304 = vmatprep.subr.mxu0 0.0
        %1305 = vmatpush2.msra.mxu0 0.0
        %1306 = vmatprep.subr.mxu0 0.0
        %1307 = vmatpush2.msra.mxu0 0.0
        %1308 = vmatprep.subr.mxu0 0.0
        %1309 = vmatpush2.msra.mxu0 0.0
        %1310 = vmatprep.subr.mxu0 0.0
        %1311 = vmatpush2.msra.mxu0 0.0
        %1312 = vmatprep.subr.mxu0 0.0
        %1313 = vmatpush2.msra.mxu0 0.0
        %1314 = vmatprep.subr.mxu0 0.0
        %1315 = vmatpush2.msra.mxu0 0.0
        %1316 = vmatprep.subr.mxu0 0.0
        %1317 = vmatpush2.msra.mxu0 0.0
        %1318 = vmatprep.subr.mxu0 0.0
        %1319 = vmatpush2.msra.mxu0 0.0
        %1320 = vmatprep.subr.mxu0 0.0
        %1321 = vmatpush2.msra.mxu0 0.0
        %1322 = vmatprep.subr.mxu0 0.0
        %1323 = vmatpush2.msra.mxu0 0.0
        %1324 = vmatprep.subr.mxu0 0.0
        %1325 = vmatpush2.msra.mxu0 0.0
        %1326 = vmatprep.subr.mxu0 0.0
        %1327 = vmatpush2.msra.mxu0 0.0
        %1328 = vmatprep.subr.mxu0 0.0
        %1329 = vmatpush2.msra.mxu0 0.0
        %1330 = vmatprep.subr.mxu0 0.0
        %1331 = vmatpush2.msra.mxu0 0.0
        %1332 = vmatprep.mubr.f32.mxu0 0.0
        %1333 = vmatmul.mubr.f32.gmra.mxu0 %v1263
        %v1334 = vpop.f32.mrf.mxu0
        %v1335 = vadd.f32 %v1261, %v1334
        %v1336 = vpop.f32.mrf.mxu0
        %1337 = vmatprep.mubr.f32.mxu0 0.0
        %1338 = vmatmul.mubr.f32.gmra.mxu0 %v1266
        %v1339 = vpop.f32.mrf.mxu0
        %v1340 = vadd.f32 %v1261, %v1339
        %v1341 = vpop.f32.mrf.mxu0
        %1342 = vdwg.mxu0
        %v1343 = vadd.f32 %v454, %v1335
        %v1344 = vadd.f32 %v455, %v1340
        %v1345 = vsel %vm467, %v1343, 0.0
        %1346 = vadd.xlane.f32.xlu0 %v1345
        %v1347 = vpop.xlane.xlu0 %1346
        %v1348 = vsel %vm467, %v1344, 0.0
        %1349 = vadd.xlane.f32.xlu0 %v1348
        %v1350 = vpop.xlane.xlu0 %1349
        %v1351 = vrcp.pop 32.0
        %v1352 = vmul.f32 %v1347, %v1351
        %v1353 = vmul.f32 %v1350, %v1351
        %v1354 = vsub.f32 %v1343, %v1352
        %v1355 = vsub.f32 %v1344, %v1353
        %v1356 = vmul.f32 %v1354, %v1354
        %v1357 = vmul.f32 %v1355, %v1355
        %v1358 = vsel %vm467, %v1356, 0.0
        %1359 = vadd.xlane.f32.xlu0 %v1358
        %v1360 = vpop.xlane.xlu0 %1359
        %v1361 = vsel %vm467, %v1357, 0.0
        %1362 = vadd.xlane.f32.xlu0 %v1361
        %v1363 = vpop.xlane.xlu0 %1362
        %v1364 = vmul.f32 %v1360, %v1351
        %v1365 = vmul.f32 %v1363, %v1351
        %v1366 = vadd.f32 %v1364, 1e-05
        %v1367 = vadd.f32 %v1365, 1e-05
        %v1368 = vrsqrt.pop %v1366
        %v1369 = vrsqrt.pop %v1367
        %v1370 = vmul.f32 %v1354, %v1368
        %v1371 = vmul.f32 %v1355, %v1369
        %v1372 = vlaneseq
        %v1373 = vshrl.u32 %v1372, 7
        %v1374 = vsub.s32 0, %v1373
        %v1375 = vrot.slane %v460, %v1374
        %v1376 = vmul.f32 %v1370, %v1375
        %v1377 = vmul.f32 %v1371, %v1375
        %v1378 = vlaneseq
        %v1379 = vshrl.u32 %v1378, 7
        %v1380 = vsub.s32 0, %v1379
        %v1381 = vrot.slane %v461, %v1380
        %v1382 = vadd.f32 %v1376, %v1381
        %v1383 = vadd.f32 %v1377, %v1381
        %v1384 = vld [vmem:[%s435] sm:$0xff]
        %v1385 = vld [vmem:[%s435 + $0x8] sm:$0xff]
        %v1386 = vld [vmem:[%s435 + $0x10] sm:$0xff]
        %v1387 = vld [vmem:[%s435 + $0x18] sm:$0xff]
        %v1388 = vld [vmem:[%s438] sm:$0x1]
        %v1390 = vlaneseq
        %v1391 = vshrl.u32 %v1390, 7
        %v1392 = vsub.s32 0, %v1391
        %v1393 = vrot.slane %v1388, %v1392
        %v1396 = vsel %vm467, %v1382, 0
        %v1399 = vsel %vm467, %v1383, 0
        %1401 = vmatprep.subr.mxu0 0.0
        %1402 = vmatpush1.msra.mxu0 0.0
        %1403 = vmatprep.subr.mxu0 0.0
        %1404 = vmatpush1.msra.mxu0 0.0
        %1405 = vmatprep.subr.mxu0 0.0
        %1406 = vmatpush1.msra.mxu0 0.0
        %1407 = vmatprep.subr.mxu0 0.0
        %1408 = vmatpush1.msra.mxu0 0.0
        %1409 = vmatprep.subr.mxu0 0.0
        %1410 = vmatpush1.msra.mxu0 0.0
        %1411 = vmatprep.subr.mxu0 0.0
        %1412 = vmatpush1.msra.mxu0 0.0
        %1413 = vmatprep.subr.mxu0 0.0
        %1414 = vmatpush1.msra.mxu0 0.0
        %1415 = vmatprep.subr.mxu0 0.0
        %1416 = vmatpush1.msra.mxu0 0.0
        %1417 = vmatprep.subr.mxu0 0.0
        %1418 = vmatpush1.msra.mxu0 0.0
        %1419 = vmatprep.subr.mxu0 0.0
        %1420 = vmatpush1.msra.mxu0 0.0
        %1421 = vmatprep.subr.mxu0 0.0
        %1422 = vmatpush1.msra.mxu0 0.0
        %1423 = vmatprep.subr.mxu0 0.0
        %1424 = vmatpush1.msra.mxu0 0.0
        %1425 = vmatprep.subr.mxu0 0.0
        %1426 = vmatpush1.msra.mxu0 %v1387
        %1427 = vmatprep.subr.mxu0 0.0
        %1428 = vmatpush1.msra.mxu0 %v1386
        %1429 = vmatprep.subr.mxu0 0.0
        %1430 = vmatpush1.msra.mxu0 %v1385
        %1431 = vmatprep.subr.mxu0 0.0
        %1432 = vmatpush1.msra.mxu0 %v1384
        %1433 = vmatprep.subr.mxu0 0.0
        %1434 = vmatpush2.msra.mxu0 0.0
        %1435 = vmatprep.subr.mxu0 0.0
        %1436 = vmatpush2.msra.mxu0 0.0
        %1437 = vmatprep.subr.mxu0 0.0
        %1438 = vmatpush2.msra.mxu0 0.0
        %1439 = vmatprep.subr.mxu0 0.0
        %1440 = vmatpush2.msra.mxu0 0.0
        %1441 = vmatprep.subr.mxu0 0.0
        %1442 = vmatpush2.msra.mxu0 0.0
        %1443 = vmatprep.subr.mxu0 0.0
        %1444 = vmatpush2.msra.mxu0 0.0
        %1445 = vmatprep.subr.mxu0 0.0
        %1446 = vmatpush2.msra.mxu0 0.0
        %1447 = vmatprep.subr.mxu0 0.0
        %1448 = vmatpush2.msra.mxu0 0.0
        %1449 = vmatprep.subr.mxu0 0.0
        %1450 = vmatpush2.msra.mxu0 0.0
        %1451 = vmatprep.subr.mxu0 0.0
        %1452 = vmatpush2.msra.mxu0 0.0
        %1453 = vmatprep.subr.mxu0 0.0
        %1454 = vmatpush2.msra.mxu0 0.0
        %1455 = vmatprep.subr.mxu0 0.0
        %1456 = vmatpush2.msra.mxu0 0.0
        %1457 = vmatprep.subr.mxu0 0.0
        %1458 = vmatpush2.msra.mxu0 0.0
        %1459 = vmatprep.subr.mxu0 0.0
        %1460 = vmatpush2.msra.mxu0 0.0
        %1461 = vmatprep.subr.mxu0 0.0
        %1462 = vmatpush2.msra.mxu0 0.0
        %1463 = vmatprep.subr.mxu0 0.0
        %1464 = vmatpush2.msra.mxu0 0.0
        %1465 = vmatprep.mubr.f32.mxu0 0.0
        %1466 = vmatmul.mubr.f32.gmra.mxu0 %v1396
        %v1467 = vpop.f32.mrf.mxu0
        %v1468 = vadd.f32 %v1393, %v1467
        %v1469 = vpop.f32.mrf.mxu0
        %1470 = vmatprep.mubr.f32.mxu0 0.0
        %1471 = vmatmul.mubr.f32.gmra.mxu0 %v1399
        %v1472 = vpop.f32.mrf.mxu0
        %v1473 = vadd.f32 %v1393, %v1472
        %v1474 = vpop.f32.mrf.mxu0
        %1475 = vdwg.mxu0
        %v1476 = vmul.f32 %v1468, 0.5
        %v1477 = vmul.f32 %v1473, 0.5
        %v1478 = vmul.f32 %v1468, 0.044715
        %v1479 = vmul.f32 %v1473, 0.044715
        %v1480 = vmul.f32 %v1478, %v1468
        %v1481 = vmul.f32 %v1479, %v1473
        %v1482 = vmul.f32 %v1480, %v1468
        %v1483 = vmul.f32 %v1481, %v1473
        %v1484 = vadd.f32 %v1468, %v1482
        %v1485 = vadd.f32 %v1473, %v1483
        %v1486 = vmul.f32 %v1484, 0.7978846
        %v1487 = vmul.f32 %v1485, 0.7978846
        %v1488 = vtanh.pop %v1486
        %v1489 = vtanh.pop %v1487
        %v1490 = vadd.f32 %v1488, 1.0
        %v1491 = vadd.f32 %v1489, 1.0
        %v1492 = vmul.f32 %v1476, %v1490
        %v1493 = vmul.f32 %v1477, %v1491
        %v1494 = vld [vmem:[%s443] sm:$0xff]
        %v1495 = vld [vmem:[%s443 + $0x8] sm:$0xff]
        %v1496 = vld [vmem:[%s443 + $0x10] sm:$0xff]
        %v1497 = vld [vmem:[%s443 + $0x18] sm:$0xff]
        %v1498 = vld [vmem:[%s443 + $0x20] sm:$0xff]
        %v1499 = vld [vmem:[%s443 + $0x28] sm:$0xff]
        %v1500 = vld [vmem:[%s443 + $0x30] sm:$0xff]
        %v1501 = vld [vmem:[%s443 + $0x38] sm:$0xff]
        %v1502 = vlaneseq
        %v1503 = vshrl.u32 %v1502, 7
        %v1504 = vsub.s32 0, %v1503
        %v1505 = vrot.slane %v462, %v1504
        %vm1506 = vcmask 523264
        %v1508 = vsel %vm1506, %v1492, 0
        %v1511 = vsel %vm1506, %v1493, 0
        %1513 = vmatprep.subr.mxu0 0.0
        %1514 = vmatpush1.msra.mxu0 0.0
        %1515 = vmatprep.subr.mxu0 0.0
        %1516 = vmatpush1.msra.mxu0 0.0
        %1517 = vmatprep.subr.mxu0 0.0
        %1518 = vmatpush1.msra.mxu0 0.0
        %1519 = vmatprep.subr.mxu0 0.0
        %1520 = vmatpush1.msra.mxu0 0.0
        %1521 = vmatprep.subr.mxu0 0.0
        %1522 = vmatpush1.msra.mxu0 0.0
        %1523 = vmatprep.subr.mxu0 0.0
        %1524 = vmatpush1.msra.mxu0 0.0
        %1525 = vmatprep.subr.mxu0 0.0
        %1526 = vmatpush1.msra.mxu0 0.0
        %1527 = vmatprep.subr.mxu0 0.0
        %1528 = vmatpush1.msra.mxu0 0.0
        %1529 = vmatprep.subr.mxu0 0.0
        %1530 = vmatpush1.msra.mxu0 %v1501
        %1531 = vmatprep.subr.mxu0 0.0
        %1532 = vmatpush1.msra.mxu0 %v1500
        %1533 = vmatprep.subr.mxu0 0.0
        %1534 = vmatpush1.msra.mxu0 %v1499
        %1535 = vmatprep.subr.mxu0 0.0
        %1536 = vmatpush1.msra.mxu0 %v1498
        %1537 = vmatprep.subr.mxu0 0.0
        %1538 = vmatpush1.msra.mxu0 %v1497
        %1539 = vmatprep.subr.mxu0 0.0
        %1540 = vmatpush1.msra.mxu0 %v1496
        %1541 = vmatprep.subr.mxu0 0.0
        %1542 = vmatpush1.msra.mxu0 %v1495
        %1543 = vmatprep.subr.mxu0 0.0
        %1544 = vmatpush1.msra.mxu0 %v1494
        %1545 = vmatprep.subr.mxu0 0.0
        %1546 = vmatpush2.msra.mxu0 0.0
        %1547 = vmatprep.subr.mxu0 0.0
        %1548 = vmatpush2.msra.mxu0 0.0
        %1549 = vmatprep.subr.mxu0 0.0
        %1550 = vmatpush2.msra.mxu0 0.0
        %1551 = vmatprep.subr.mxu0 0.0
        %1552 = vmatpush2.msra.mxu0 0.0
        %1553 = vmatprep.subr.mxu0 0.0
        %1554 = vmatpush2.msra.mxu0 0.0
        %1555 = vmatprep.subr.mxu0 0.0
        %1556 = vmatpush2.msra.mxu0 0.0
        %1557 = vmatprep.subr.mxu0 0.0
        %1558 = vmatpush2.msra.mxu0 0.0
        %1559 = vmatprep.subr.mxu0 0.0
        %1560 = vmatpush2.msra.mxu0 0.0
        %1561 = vmatprep.subr.mxu0 0.0
        %1562 = vmatpush2.msra.mxu0 0.0
        %1563 = vmatprep.subr.mxu0 0.0
        %1564 = vmatpush2.msra.mxu0 0.0
        %1565 = vmatprep.subr.mxu0 0.0
        %1566 = vmatpush2.msra.mxu0 0.0
        %1567 = vmatprep.subr.mxu0 0.0
        %1568 = vmatpush2.msra.mxu0 0.0
        %1569 = vmatprep.subr.mxu0 0.0
        %1570 = vmatpush2.msra.mxu0 0.0
        %1571 = vmatprep.subr.mxu0 0.0
        %1572 = vmatpush2.msra.mxu0 0.0
        %1573 = vmatprep.subr.mxu0 0.0
        %1574 = vmatpush2.msra.mxu0 0.0
        %1575 = vmatprep.subr.mxu0 0.0
        %1576 = vmatpush2.msra.mxu0 0.0
        %1577 = vmatprep.mubr.f32.mxu0 0.0
        %1578 = vmatmul.mubr.f32.gmra.mxu0 %v1508
        %v1579 = vpop.f32.mrf.mxu0
        %v1580 = vadd.f32 %v1505, %v1579
        %v1581 = vpop.f32.mrf.mxu0
        %1582 = vmatprep.mubr.f32.mxu0 0.0
        %1583 = vmatmul.mubr.f32.gmra.mxu0 %v1511
        %v1584 = vpop.f32.mrf.mxu0
        %v1585 = vadd.f32 %v1505, %v1584
        %v1586 = vpop.f32.mrf.mxu0
        %1587 = vdwg.mxu0
        %v1588 = vadd.f32 %v1343, %v1580
        %v1589 = vadd.f32 %v1344, %v1585
        %1590 = vst.msk [vmem:[#allocation2] sm:$0xff] %vm467, %v1588
        %1591 = vst.msk [vmem:[#allocation2 + $0x8] sm:$0xff] %vm467, %v1589
        %p1592 = scmp.eq.s32.totalorder %s29, 1
        // Predicated region
        $region65: #{tpu_custom_call.1} parent=51 // pred_check
          %p1593 = pneg %p1592
        $region66: #{tpu_custom_call.1} parent=51 // pred_check_branch
          %1595 = sbr.rel (%p1593) target = $region68
        $region67: #{tpu_custom_call.1} parent=51 // pred_region
          %v1596 = vld [vmem:[%s7] sm:$0x1]
          %v1597 = vld [vmem:[%s7 + $0x1] sm:$0x1]
          %v1598 = vsel %vm467, %v1588, 0.0
          %1599 = vadd.xlane.f32.xlu0 %v1598
          %v1600 = vpop.xlane.xlu0 %1599
          %v1601 = vsel %vm467, %v1589, 0.0
          %1602 = vadd.xlane.f32.xlu0 %v1601
          %v1603 = vpop.xlane.xlu0 %1602
          %v1604 = vmul.f32 %v1600, %v1351
          %v1605 = vmul.f32 %v1603, %v1351
          %v1606 = vsub.f32 %v1588, %v1604
          %v1607 = vsub.f32 %v1589, %v1605
          %v1608 = vmul.f32 %v1606, %v1606
          %v1609 = vmul.f32 %v1607, %v1607
          %v1610 = vsel %vm467, %v1608, 0.0
          %1611 = vadd.xlane.f32.xlu0 %v1610
          %v1612 = vpop.xlane.xlu0 %1611
          %v1613 = vsel %vm467, %v1609, 0.0
          %1614 = vadd.xlane.f32.xlu0 %v1613
          %v1615 = vpop.xlane.xlu0 %1614
          %v1616 = vmul.f32 %v1612, %v1351
          %v1617 = vmul.f32 %v1615, %v1351
          %v1618 = vadd.f32 %v1616, 1e-05
          %v1619 = vadd.f32 %v1617, 1e-05
          %v1620 = vrsqrt.pop %v1618
          %v1621 = vrsqrt.pop %v1619
          %v1622 = vmul.f32 %v1606, %v1620
          %v1623 = vmul.f32 %v1607, %v1621
          %v1624 = vlaneseq
          %v1625 = vshrl.u32 %v1624, 7
          %v1626 = vsub.s32 0, %v1625
          %v1627 = vrot.slane %v1596, %v1626
          %v1628 = vmul.f32 %v1622, %v1627
          %v1629 = vmul.f32 %v1623, %v1627
          %v1630 = vlaneseq
          %v1631 = vshrl.u32 %v1630, 7
          %v1632 = vsub.s32 0, %v1631
          %v1633 = vrot.slane %v1597, %v1632
          %v1634 = vadd.f32 %v1628, %v1633
          %v1635 = vadd.f32 %v1629, %v1633
          %1636 = vst.msk [vmem:[#allocation9] sm:$0xff] %vm467, %v1634
          %1637 = vst.msk [vmem:[#allocation9 + $0x8] sm:$0xff] %vm467, %v1635
        $region68: #{tpu_custom_call.1} parent=51 // pred_fallthru
          _
        // Predicated region
        $region69: #{tpu_custom_call.1} parent=51 // pred_check
          %p1638 = pneg %p257
        $region70: #{tpu_custom_call.1} parent=51 // pred_check_branch
          %1640 = sbr.rel (%p1638) target = $region72
        $region71: #{tpu_custom_call.1} parent=51 // pred_region
          %s1641 = smul.u32 2, %s28
          %s1643 = ssub.s32 256, 256
          %1644 = vsyncadd [#allocation6], %s1643
          %s1645 = smul.addr %s1641, 128
          %s1646 = scalar_lea.hbm %s8, %s1645
          %s1647 = sshll.u32 [#allocation9], 4
          %s1648 = int_to_ptr.vmem [resolvable:$true] %s1647
          %1653 = dma.vmem_to_hbm [thread:$0]  %s1648, 256, %s1646, [#allocation6], 128, 128, 8
        $region72: #{tpu_custom_call.1} parent=51 // pred_fallthru
          _
        // Predicated region
        $region73: #{tpu_custom_call.1} parent=51 // pred_check
          %p1654 = pneg %p257
        $region74: #{tpu_custom_call.1} parent=51 // pred_check_branch
          %1656 = sbr.rel (%p1654) target = $region76
        $region75: #{tpu_custom_call.1} parent=51 // pred_region
          %1657 = dma.done [#allocation6], 256
        $region76: #{tpu_custom_call.1} parent=51 // pred_fallthru
          _
      $region52: #{tpu_custom_call.1} parent=5 // pred_fallthru
        _
      %p1658 = scmp.le.s32.totalorder 2, %s19
      // Predicated region
      $region77: #{tpu_custom_call.1} parent=5 // pred_check
        %p1659 = pneg %p1658
      $region78: #{tpu_custom_call.1} parent=5 // pred_check_branch
        %1661 = sbr.rel (%p1659) target = $region80
      $region79: #{tpu_custom_call.1} parent=5 // pred_region
        %s1662 = ssub.s32 %s19, 2
      $region80: #{tpu_custom_call.1} parent=5 // pred_fallthru
        _
    $region6: #{tpu_custom_call.1} parent=1 // loop_footer
      %s23 = sadd.s32 1, %s19
    $region7: #{tpu_custom_call.1} parent=1 // loop_footer_branch
      %18 = sbr.rel target = $region3
    $region8: #{tpu_custom_call.1} parent=1 // loop_exit
      _
    %1663 = vsyncpa [#allocation5], 1
    %s1664 = scalar_lea.sflag [#allocation5], 1
    %1665 = vsyncpa %s1664, 1
    %1666 = vsyncpa [#allocation8], 1
    %s1667 = scalar_lea.sflag [#allocation8], 1
    %1668 = vsyncpa %s1667, 1
    %1669 = vsyncpa [#allocation6], 1
    %s1670 = scalar_lea.sflag [#allocation6], 1
    %1671 = vsyncpa %s1670, 1

</llo_original>
